<compile_context>
chip_gen: v7x
topology: tpu7x:2x2x1
jax: 0.10.0
libtpu: 0.0.40
codegen_flags: <defaults>
</compile_context>

<pallas_src>
import jax
import jax.numpy as jnp
from jax.experimental import pallas as pl
from jax.experimental.pallas import tpu as pltpu


def _se_conv_kernel(se_ref, w1_ref, b1_ref, w2_ref, x_ref, out_ref):
    # se_ref : [1, C_SE]        f32   (squeezed input x268)
    # w1_ref : [C_SE, C_MID]    bf16  (conv2d87 weight, pre-transposed)
    # b1_ref : [1, C_MID]       f32   (conv2d87 bias)
    # w2_ref : [C_OUT, C_MID]   bf16  (conv2d88 weight)
    # x_ref  : [C_MID, HW]      f32   (x265, channels on sublanes, spatial on lanes)
    # out_ref: [C_OUT, HW]      f32
    se = se_ref[...].astype(jnp.bfloat16)                                 # tiny cast
    logits = jnp.dot(se, w1_ref[...],
                     preferred_element_type=jnp.float32) + b1_ref[...]    # [1, C_MID] f32
    gate = jax.nn.sigmoid(logits).astype(jnp.bfloat16)                    # [1, C_MID] bf16
    # Fold the per-channel gate into W2 in bf16 (sublane broadcast, cheap VPU op,
    # no f32 promotion of the full weight, no transpose of the gate).
    w2_gated = w2_ref[...] * gate                                         # [C_OUT, C_MID] bf16
    x_bf16 = x_ref[...].astype(jnp.bfloat16)                              # cast in-kernel
    out_ref[...] = jnp.dot(w2_gated, x_bf16,
                           preferred_element_type=jnp.float32)            # [C_OUT, HW] f32


def prepare_params(w1, b1, w2):
    """One-time (model-init) conversion of weights to kernel dtypes/layouts."""
    c_mid, c_se = w1.shape[0], w1.shape[1]
    c_out = w2.shape[0]
    w1_t = w1.reshape(c_mid, c_se).T.astype(jnp.bfloat16)   # [C_SE, C_MID]
    b1_r = b1.reshape(1, c_mid).astype(jnp.float32)         # [1, C_MID]
    w2_r = w2.reshape(c_out, c_mid).astype(jnp.bfloat16)    # [C_OUT, C_MID]
    return w1_t, b1_r, w2_r


def se_conv_block(x268, x265, w1_t, b1_r, w2_r):
    """x268: [1, C_SE, 1, 1] f32, x265: [1, C_MID, H, W] f32
       w1_t: [C_SE, C_MID] bf16, b1_r: [1, C_MID] f32, w2_r: [C_OUT, C_MID] bf16
       returns [1, C_OUT, H, W] float32"""
    n, c_mid, h, w = x265.shape
    assert n == 1, "kernel handles batch=1 (as in the reference module)"
    c_se = x268.shape[1]
    c_out = w2_r.shape[0]
    hw = h * w

    # Free reshapes only — no cast, no pad, no post-kernel slice.
    se = x268.reshape(1, c_se)          # f32
    x = x265.reshape(c_mid, hw)         # f32

    cost = pl.CostEstimate(
        flops=2 * c_out * c_mid * hw + 2 * c_se * c_mid + c_out * c_mid,
        transcendentals=c_mid,
        bytes_accessed=(x.size * 4 + w2_r.size * 2 + w1_t.size * 2
                        + b1_r.size * 4 + se.size * 4 + c_out * hw * 4),
    )

    out = pl.pallas_call(
        _se_conv_kernel,
        out_shape=jax.ShapeDtypeStruct((c_out, hw), jnp.float32),
        grid_spec=pltpu.PrefetchScalarGridSpec(
            num_scalar_prefetch=0,
            grid=(1,),
            in_specs=[
                pl.BlockSpec((1, c_se), lambda i: (0, 0)),        # full-array blocks
                pl.BlockSpec((c_se, c_mid), lambda i: (0, 0)),
                pl.BlockSpec((1, c_mid), lambda i: (0, 0)),
                pl.BlockSpec((c_out, c_mid), lambda i: (0, 0)),
                pl.BlockSpec((c_mid, hw), lambda i: (0, 0)),
            ],
            out_specs=pl.BlockSpec((c_out, hw), lambda i: (0, 0)),
        ),
        compiler_params=pltpu.CompilerParams(
            dimension_semantics=("arbitrary",)),
        cost_estimate=cost,
    )(se, w1_t, b1_r, w2_r, x)

    return out.reshape(1, c_out, h, w)


if __name__ == "__main__":
    # Shapes implied by the module's forward pass.
    C_SE, C_MID, C_OUT, H, W = 40, 960, 160, 14, 14

    key = jax.random.PRNGKey(0)
    k1, k2, k3, k4, k5 = jax.random.split(key, 5)

    x268 = jax.random.normal(k1, (1, C_SE, 1, 1), dtype=jnp.float32)
    x265 = jax.random.normal(k2, (1, C_MID, H, W), dtype=jnp.float32)

    # Deterministic parameter init (synthetic; matches PyTorch layer shapes).
    w1 = 0.05 * jax.random.normal(k3, (C_MID, C_SE, 1, 1), dtype=jnp.float32)
    b1 = 0.05 * jax.random.normal(k4, (C_MID,), dtype=jnp.float32)
    w2 = 0.05 * jax.random.normal(k5, (C_OUT, C_MID, 1, 1), dtype=jnp.float32)

    # One-time weight preparation (model init), outside the per-call hot path.
    w1_t, b1_r, w2_r = prepare_params(w1, b1, w2)

    out = se_conv_block(x268, x265, w1_t, b1_r, w2_r)
    out = jax.block_until_ready(out)

    # Pure-JAX f32 reference of the same forward pass (kernel runs matmuls in bf16
    # with f32 accumulation, so tolerances are relaxed accordingly).
    gate = jax.nn.sigmoid(
        jnp.einsum('oc,nchw->nohw', w1.reshape(C_MID, C_SE), x268)
        + b1.reshape(1, C_MID, 1, 1))
    ref = jnp.einsum('oc,nchw->nohw', w2.reshape(C_OUT, C_MID), gate * x265)
    assert out.shape == (1, C_OUT, H, W)
    assert jnp.allclose(out, ref, atol=5e-2, rtol=5e-2)

    print("KERNEL_OK")
</pallas_src>

<mosaic_0001>
module attributes {stable_mosaic.version = 11 : i64} {
  func.func @_se_conv_kernel(%arg0: i32, %arg1: memref<1x40xf32, #tpu.memory_space<vmem>>, %arg2: memref<40x960xbf16, #tpu.memory_space<vmem>>, %arg3: memref<1x960xf32, #tpu.memory_space<vmem>>, %arg4: memref<160x960xbf16, #tpu.memory_space<vmem>>, %arg5: memref<960x196xf32, #tpu.memory_space<vmem>>, %arg6: memref<160x196xf32, #tpu.memory_space<vmem>>) attributes {dimension_semantics = [#tpu.dimension_semantics<arbitrary>], iteration_bounds = array<i64: 1>, scalar_prefetch = 0 : i64, scratch_operands = 0 : i64, tpu.core_type = #tpu.core_type<tc>, window_params = [{pipeline_mode = #tpu.pipeline_mode<synchronous>, transform_indices = @transform_0, window_bounds = array<i64: 1, 40>}, {pipeline_mode = #tpu.pipeline_mode<synchronous>, transform_indices = @transform_1, window_bounds = array<i64: 40, 960>}, {pipeline_mode = #tpu.pipeline_mode<synchronous>, transform_indices = @transform_2, window_bounds = array<i64: 1, 960>}, {pipeline_mode = #tpu.pipeline_mode<synchronous>, transform_indices = @transform_3, window_bounds = array<i64: 160, 960>}, {pipeline_mode = #tpu.pipeline_mode<synchronous>, transform_indices = @transform_4, window_bounds = array<i64: 960, 196>}, {pipeline_mode = #tpu.pipeline_mode<synchronous>, transform_indices = @transform_5, window_bounds = array<i64: 160, 196>}]} {
    %c0 = arith.constant 0 : index
    %c0_0 = arith.constant 0 : index
    %0 = vector.load %arg1[%c0, %c0_0] : memref<1x40xf32, #tpu.memory_space<vmem>>, vector<1x40xf32>
    %1 = arith.truncf %0 : vector<1x40xf32> to vector<1x40xbf16>
    %c0_1 = arith.constant 0 : index
    %c0_2 = arith.constant 0 : index
    %2 = vector.load %arg2[%c0_1, %c0_2] : memref<40x960xbf16, #tpu.memory_space<vmem>>, vector<40x960xbf16>
    %cst = arith.constant dense<0.000000e+00> : vector<1x960xf32>
    %3 = tpu.matmul %1, %2, %cst {dimension_numbers = #tpu.dot_dimension_numbers<[1], [0], [0], [1], [0, 0, 1, 1], [], []>} : vector<1x40xbf16>, vector<40x960xbf16>, vector<1x960xf32> -> vector<1x960xf32>
    %c0_3 = arith.constant 0 : index
    %c0_4 = arith.constant 0 : index
    %4 = vector.load %arg3[%c0_3, %c0_4] : memref<1x960xf32, #tpu.memory_space<vmem>>, vector<1x960xf32>
    %5 = arith.addf %3, %4 : vector<1x960xf32>
    %6 = arith.negf %5 : vector<1x960xf32>
    %7 = math.exp %6 : vector<1x960xf32>
    %cst_5 = arith.constant 1.000000e+00 : f32
    %8 = vector.broadcast %cst_5 : f32 to vector<1x960xf32>
    %9 = arith.addf %8, %7 : vector<1x960xf32>
    %10 = arith.divf %8, %9 : vector<1x960xf32>
    %11 = arith.truncf %10 : vector<1x960xf32> to vector<1x960xbf16>
    %c0_6 = arith.constant 0 : index
    %c0_7 = arith.constant 0 : index
    %12 = vector.load %arg4[%c0_6, %c0_7] : memref<160x960xbf16, #tpu.memory_space<vmem>>, vector<160x960xbf16>
    %13 = vector.broadcast %11 : vector<1x960xbf16> to vector<160x960xbf16>
    %14 = arith.mulf %12, %13 : vector<160x960xbf16>
    %c0_8 = arith.constant 0 : index
    %c0_9 = arith.constant 0 : index
    %15 = vector.load %arg5[%c0_8, %c0_9] : memref<960x196xf32, #tpu.memory_space<vmem>>, vector<960x196xf32>
    %16 = arith.truncf %15 : vector<960x196xf32> to vector<960x196xbf16>
    %cst_10 = arith.constant dense<0.000000e+00> : vector<160x196xf32>
    %17 = tpu.matmul %14, %16, %cst_10 {dimension_numbers = #tpu.dot_dimension_numbers<[1], [0], [0], [1], [0, 0, 1, 1], [], []>} : vector<160x960xbf16>, vector<960x196xbf16>, vector<160x196xf32> -> vector<160x196xf32>
    %c0_11 = arith.constant 0 : index
    %c0_12 = arith.constant 0 : index
    %18 = vector.load %arg6[%c0_11, %c0_12] : memref<160x196xf32, #tpu.memory_space<vmem>>, vector<160x196xf32>
    tpu.vector_store %arg6[%c0_11, %c0_12], %17 {strides = array<i32>} : memref<160x196xf32, #tpu.memory_space<vmem>>, vector<160x196xf32>,
    return
  }
  func.func @transform_0(%arg0: i32) -> (i32, i32) {
    %c0_i32 = arith.constant 0 : i32
    %c0_i32_0 = arith.constant 0 : i32
    %c0_i32_1 = arith.constant 0 : i32
    return %c0_i32, %c0_i32_0 : i32, i32
  }
  func.func @transform_1(%arg0: i32) -> (i32, i32) {
    %c0_i32 = arith.constant 0 : i32
    %c0_i32_0 = arith.constant 0 : i32
    %c0_i32_1 = arith.constant 0 : i32
    return %c0_i32, %c0_i32_0 : i32, i32
  }
  func.func @transform_2(%arg0: i32) -> (i32, i32) {
    %c0_i32 = arith.constant 0 : i32
    %c0_i32_0 = arith.constant 0 : i32
    %c0_i32_1 = arith.constant 0 : i32
    return %c0_i32, %c0_i32_0 : i32, i32
  }
  func.func @transform_3(%arg0: i32) -> (i32, i32) {
    %c0_i32 = arith.constant 0 : i32
    %c0_i32_0 = arith.constant 0 : i32
    %c0_i32_1 = arith.constant 0 : i32
    return %c0_i32, %c0_i32_0 : i32, i32
  }
  func.func @transform_4(%arg0: i32) -> (i32, i32) {
    %c0_i32 = arith.constant 0 : i32
    %c0_i32_0 = arith.constant 0 : i32
    %c0_i32_1 = arith.constant 0 : i32
    return %c0_i32, %c0_i32_0 : i32, i32
  }
  func.func @transform_5(%arg0: i32) -> (i32, i32) {
    %c0_i32 = arith.constant 0 : i32
    %c0_i32_0 = arith.constant 0 : i32
    %c0_i32_1 = arith.constant 0 : i32
    return %c0_i32, %c0_i32_0 : i32, i32
  }
}

</mosaic_0001>

<llo_original>
// kernel: tpu_custom_call.1
$region0: #{tpu_custom_call.1}
  #allocation0 [shape = 'u32[]', space=smem, size = 0x4, offset = 0x4, fixed_abs, tag = 'smem constant byte address 0x4 - core index']
  #allocation1 [shape = 'u32[144,128]{1,0:T(1,128)}', space=vmem, size = 0x12000, scoped, tag = 'internal scratch']
  %s0 = inlined_call_operand.vmem [shape: f32[1,40], index: 0, kind: input, shape index: {}]
  %s1 = inlined_call_operand.vmem [shape: bf16[40,960], index: 1, kind: input, shape index: {}]
  %s2 = inlined_call_operand.vmem [shape: f32[1,960], index: 2, kind: input, shape index: {}]
  %s3 = inlined_call_operand.vmem [shape: bf16[160,960], index: 3, kind: input, shape index: {}]
  %s4 = inlined_call_operand.vmem [shape: f32[960,196], index: 4, kind: input, shape index: {}]
  %s5 = inlined_call_operand.hbm [shape: f32[160,196], index: 5, kind: output, shape index: {}]
  %s6 = sld [smem:[#allocation0]]
  $region30: #{tpu_custom_call.1} parent=0
    _
  %s8 = ssub.s32 1, %s6
  %s9 = scalar_select 0, %s8, %s6
  $region1: #{tpu_custom_call.1} parent=0
    #allocation2 [shape = 'u8[163840]{0}', space=vmem, size = 0x28000, scoped, tag = 'output window, operand 0, single buffered']
    #allocation3 [shape = 's32[1]{0}', space=sflag, size = 0x4, scoped, tag = 'scoped memory for tpu_custom_call.1']
    %10 = vsyncpa [#allocation3], 0
    // Predicated region
    $region2: #{tpu_custom_call.1} parent=1 // pred_check
      _
    $region3: #{tpu_custom_call.1} parent=1 // pred_check_branch
      %12 = sbr.rel (0) target = $region5
    $region4: #{tpu_custom_call.1} parent=1 // pred_region
      _
    $region5: #{tpu_custom_call.1} parent=1 // pred_fallthru
      _
    // Predicated region
    $region6: #{tpu_custom_call.1} parent=1 // pred_check
      _
    $region7: #{tpu_custom_call.1} parent=1 // pred_check_branch
      %14 = sbr.rel (0) target = $region9
    $region8: #{tpu_custom_call.1} parent=1 // pred_region
      _
    $region9: #{tpu_custom_call.1} parent=1 // pred_fallthru
      _
    // Predicated region
    $region10: #{tpu_custom_call.1} parent=1 // pred_check
      _
    $region11: #{tpu_custom_call.1} parent=1 // pred_check_branch
      %16 = sbr.rel (0) target = $region13
    $region12: #{tpu_custom_call.1} parent=1 // pred_region
      _
    $region13: #{tpu_custom_call.1} parent=1 // pred_fallthru
      _
    // Predicated region
    $region14: #{tpu_custom_call.1} parent=1 // pred_check
      _
    $region15: #{tpu_custom_call.1} parent=1 // pred_check_branch
      %18 = sbr.rel (0) target = $region17
    $region16: #{tpu_custom_call.1} parent=1 // pred_region
      _
    $region17: #{tpu_custom_call.1} parent=1 // pred_fallthru
      _
    // Predicated region
    $region18: #{tpu_custom_call.1} parent=1 // pred_check
      _
    $region19: #{tpu_custom_call.1} parent=1 // pred_check_branch
      %20 = sbr.rel (0) target = $region21
    $region20: #{tpu_custom_call.1} parent=1 // pred_region
      _
    $region21: #{tpu_custom_call.1} parent=1 // pred_fallthru
      _
    %v22 = vld [vmem:[%s0] sm:$0x1]
    %v23 = vpack.c.bf16 %v22, %v22
    %v24 = vld [vmem:[%s1] sm:$0xff]
    %v25 = vld [vmem:[%s1 + $0x8] sm:$0xff]
    %v26 = vld [vmem:[%s1 + $0x10] sm:$0xff]
    %v27 = vld [vmem:[%s1 + $0x18] sm:$0xff]
    %v28 = vld [vmem:[%s1 + $0x20] sm:$0xff]
    %v29 = vld [vmem:[%s1 + $0x28] sm:$0xff]
    %v30 = vld [vmem:[%s1 + $0x30] sm:$0xff]
    %v31 = vld [vmem:[%s1 + $0x38] sm:$0xff]
    %v32 = vld [vmem:[%s1 + $0x40] sm:$0xff]
    %v33 = vld [vmem:[%s1 + $0x48] sm:$0xff]
    %v34 = vld [vmem:[%s1 + $0x50] sm:$0xff]
    %v35 = vld [vmem:[%s1 + $0x58] sm:$0xff]
    %v36 = vld [vmem:[%s1 + $0x60] sm:$0xff]
    %v37 = vld [vmem:[%s1 + $0x68] sm:$0xff]
    %v38 = vld [vmem:[%s1 + $0x70] sm:$0xff]
    %v39 = vld [vmem:[%s1 + $0x78] sm:$0xff]
    %v40 = vld [vmem:[%s1 + $0x80] sm:$0xff]
    %v41 = vld [vmem:[%s1 + $0x88] sm:$0xff]
    %v42 = vld [vmem:[%s1 + $0x90] sm:$0xff]
    %v43 = vld [vmem:[%s1 + $0x98] sm:$0xff]
    %v44 = vld [vmem:[%s2] sm:$0xff]
    %v65 = vunpack.c.l.b16 %v24
    %v66 = vunpack.c.h.b16 %v24
    %v67 = vunpack.c.l.b16 %v25
    %v68 = vunpack.c.h.b16 %v25
    %v69 = vunpack.c.l.b16 %v26
    %v70 = vunpack.c.h.b16 %v26
    %v71 = vunpack.c.l.b16 %v27
    %v72 = vunpack.c.h.b16 %v27
    %v73 = vunpack.c.l.b16 %v28
    %v74 = vunpack.c.h.b16 %v28
    %v75 = vunpack.c.l.b16 %v29
    %v76 = vunpack.c.h.b16 %v29
    %v77 = vunpack.c.l.b16 %v30
    %v78 = vunpack.c.h.b16 %v30
    %v79 = vunpack.c.l.b16 %v31
    %v80 = vunpack.c.h.b16 %v31
    %v81 = vunpack.c.l.b16 %v32
    %v82 = vunpack.c.h.b16 %v32
    %v83 = vunpack.c.l.b16 %v33
    %v84 = vunpack.c.h.b16 %v33
    %v85 = vunpack.c.l.b16 %v34
    %v86 = vunpack.c.h.b16 %v34
    %v87 = vunpack.c.l.b16 %v35
    %v88 = vunpack.c.h.b16 %v35
    %v89 = vunpack.c.l.b16 %v36
    %v90 = vunpack.c.h.b16 %v36
    %v91 = vunpack.c.l.b16 %v37
    %v92 = vunpack.c.h.b16 %v37
    %v93 = vunpack.c.l.b16 %v38
    %v94 = vunpack.c.h.b16 %v38
    %v95 = vunpack.c.l.b16 %v39
    %v96 = vunpack.c.h.b16 %v39
    %v97 = vunpack.c.l.b16 %v40
    %v98 = vunpack.c.h.b16 %v40
    %v99 = vunpack.c.l.b16 %v41
    %v100 = vunpack.c.h.b16 %v41
    %v101 = vunpack.c.l.b16 %v42
    %v102 = vunpack.c.h.b16 %v42
    %v103 = vunpack.c.l.b16 %v43
    %v104 = vunpack.c.h.b16 %v43
    %v105 = vpack.c.b16 %v73, %v65
    %v106 = vpack.c.b16 %v74, %v66
    %v107 = vpack.c.b16 %v75, %v67
    %v108 = vpack.c.b16 %v76, %v68
    %v109 = vpack.c.b16 %v77, %v69
    %v110 = vpack.c.b16 %v78, %v70
    %v111 = vpack.c.b16 %v79, %v71
    %v112 = vpack.c.b16 %v80, %v72
    %v113 = vpack.c.b16 %v89, %v81
    %v114 = vpack.c.b16 %v90, %v82
    %v115 = vpack.c.b16 %v91, %v83
    %v116 = vpack.c.b16 %v92, %v84
    %v117 = vpack.c.b16 %v93, %v85
    %v118 = vpack.c.b16 %v94, %v86
    %v119 = vpack.c.b16 %v95, %v87
    %v120 = vpack.c.b16 %v96, %v88
    %v121 = vpack.c.b16 %v97, %v97
    %v122 = vpack.c.b16 %v98, %v98
    %v123 = vpack.c.b16 %v99, %v99
    %v124 = vpack.c.b16 %v100, %v100
    %v125 = vpack.c.b16 %v101, %v101
    %v126 = vpack.c.b16 %v102, %v102
    %v127 = vpack.c.b16 %v103, %v103
    %v128 = vpack.c.b16 %v104, %v104
    %v146 = vlaneseq
    %v147 = vshrl.u32 %v146, 7
    %v148 = vsub.s32 0, %v147
    %v149 = vrot.slane %v44, %v148
    %v150 = vlaneseq
    %v151 = vshrl.u32 %v150, 7
    %v152 = vsub.s32 1, %v151
    %v153 = vrot.slane %v44, %v152
    %v154 = vlaneseq
    %v155 = vshrl.u32 %v154, 7
    %v156 = vsub.s32 2, %v155
    %v157 = vrot.slane %v44, %v156
    %v158 = vlaneseq
    %v159 = vshrl.u32 %v158, 7
    %v160 = vsub.s32 3, %v159
    %v161 = vrot.slane %v44, %v160
    %v162 = vlaneseq
    %v163 = vshrl.u32 %v162, 7
    %v164 = vsub.s32 4, %v163
    %v165 = vrot.slane %v44, %v164
    %v166 = vlaneseq
    %v167 = vshrl.u32 %v166, 7
    %v168 = vsub.s32 5, %v167
    %v169 = vrot.slane %v44, %v168
    %v170 = vlaneseq
    %v171 = vshrl.u32 %v170, 7
    %v172 = vsub.s32 6, %v171
    %v173 = vrot.slane %v44, %v172
    %v174 = vlaneseq
    %v175 = vshrl.u32 %v174, 7
    %v176 = vsub.s32 7, %v175
    %v177 = vrot.slane %v44, %v176
    %vm186 = vcmask 326656
    %v188 = vsel %vm186, %v23, 0
    %vm190 = vcmask 1043456
    %v192 = vsel %vm190, %v121, 0
    %v195 = vsel %vm190, %v122, 0
    %v198 = vsel %vm190, %v123, 0
    %v201 = vsel %vm190, %v124, 0
    %v204 = vsel %vm190, %v125, 0
    %v207 = vsel %vm190, %v126, 0
    %v210 = vsel %vm190, %v127, 0
    %v213 = vsel %vm190, %v128, 0
    %215 = vmatprep.subr.bf16.mxu0 %v106
    %216 = vmatpush1.bf16.msra.mxu0 %v105
    %217 = vmatprep.subr.bf16.mxu0 %v114
    %218 = vmatpush1.bf16.msra.mxu0 %v113
    %219 = vmatprep.subr.bf16.mxu0 %v195
    %220 = vmatpush1.bf16.msra.mxu0 %v192
    %221 = vmatprep.subr.bf16.mxu0 0
    %222 = vmatpush1.bf16.msra.mxu0 0
    %223 = vmatprep.subr.bf16.mxu0 0
    %224 = vmatpush1.bf16.msra.mxu0 0
    %225 = vmatprep.subr.bf16.mxu0 0
    %226 = vmatpush1.bf16.msra.mxu0 0
    %227 = vmatprep.subr.bf16.mxu0 0
    %228 = vmatpush1.bf16.msra.mxu0 0
    %229 = vmatprep.subr.bf16.mxu0 0
    %230 = vmatpush1.bf16.msra.mxu0 0
    %231 = vmatprep.subr.bf16.mxu0 0
    %232 = vmatpush1.bf16.msra.mxu0 0
    %233 = vmatprep.subr.bf16.mxu0 0
    %234 = vmatpush1.bf16.msra.mxu0 0
    %235 = vmatprep.subr.bf16.mxu0 0
    %236 = vmatpush1.bf16.msra.mxu0 0
    %237 = vmatprep.subr.bf16.mxu0 0
    %238 = vmatpush1.bf16.msra.mxu0 0
    %239 = vmatprep.subr.bf16.mxu0 0
    %240 = vmatpush1.bf16.msra.mxu0 0
    %241 = vmatprep.subr.bf16.mxu0 0
    %242 = vmatpush1.bf16.msra.mxu0 0
    %243 = vmatprep.subr.bf16.mxu0 0
    %244 = vmatpush1.bf16.msra.mxu0 0
    %245 = vmatprep.subr.bf16.mxu0 0
    %246 = vmatpush1.bf16.msra.mxu0 0
    %247 = vmatprep.mubr.bf16.mxu0 0
    %248 = vmatmul.mubr.bf16.gmra.mrb[0].mxu0 %v188
    %v249 = vpop.f32.mrb[0].mxu0
    %v250 = vadd.f32 %v149, %v249
    %v251 = vpop.f32.mrb[0].mxu0
    %v252 = vadd.f32 %v153, %v251
    %v253 = vpop.f32.mrb[0].mxu0
    %v254 = vpop.f32.mrb[0].mxu0
    %255 = vdwg.mxu0
    %256 = vmatprep.subr.bf16.mxu0 %v108
    %257 = vmatpush1.bf16.msra.mxu0 %v107
    %258 = vmatprep.subr.bf16.mxu0 %v116
    %259 = vmatpush1.bf16.msra.mxu0 %v115
    %260 = vmatprep.subr.bf16.mxu0 %v201
    %261 = vmatpush1.bf16.msra.mxu0 %v198
    %262 = vmatprep.subr.bf16.mxu0 0
    %263 = vmatpush1.bf16.msra.mxu0 0
    %264 = vmatprep.subr.bf16.mxu0 0
    %265 = vmatpush1.bf16.msra.mxu0 0
    %266 = vmatprep.subr.bf16.mxu0 0
    %267 = vmatpush1.bf16.msra.mxu0 0
    %268 = vmatprep.subr.bf16.mxu0 0
    %269 = vmatpush1.bf16.msra.mxu0 0
    %270 = vmatprep.subr.bf16.mxu0 0
    %271 = vmatpush1.bf16.msra.mxu0 0
    %272 = vmatprep.subr.bf16.mxu0 0
    %273 = vmatpush1.bf16.msra.mxu0 0
    %274 = vmatprep.subr.bf16.mxu0 0
    %275 = vmatpush1.bf16.msra.mxu0 0
    %276 = vmatprep.subr.bf16.mxu0 0
    %277 = vmatpush1.bf16.msra.mxu0 0
    %278 = vmatprep.subr.bf16.mxu0 0
    %279 = vmatpush1.bf16.msra.mxu0 0
    %280 = vmatprep.subr.bf16.mxu0 0
    %281 = vmatpush1.bf16.msra.mxu0 0
    %282 = vmatprep.subr.bf16.mxu0 0
    %283 = vmatpush1.bf16.msra.mxu0 0
    %284 = vmatprep.subr.bf16.mxu0 0
    %285 = vmatpush1.bf16.msra.mxu0 0
    %286 = vmatprep.subr.bf16.mxu0 0
    %287 = vmatpush1.bf16.msra.mxu0 0
    %288 = vmatprep.mubr.bf16.mxu0 0
    %289 = vmatmul.mubr.bf16.gmra.mrb[0].mxu0 %v188
    %v290 = vpop.f32.mrb[0].mxu0
    %v291 = vadd.f32 %v157, %v290
    %v292 = vpop.f32.mrb[0].mxu0
    %v293 = vadd.f32 %v161, %v292
    %v294 = vpop.f32.mrb[0].mxu0
    %v295 = vpop.f32.mrb[0].mxu0
    %296 = vdwg.mxu0
    %297 = vmatprep.subr.bf16.mxu0 %v110
    %298 = vmatpush1.bf16.msra.mxu0 %v109
    %299 = vmatprep.subr.bf16.mxu0 %v118
    %300 = vmatpush1.bf16.msra.mxu0 %v117
    %301 = vmatprep.subr.bf16.mxu0 %v207
    %302 = vmatpush1.bf16.msra.mxu0 %v204
    %303 = vmatprep.subr.bf16.mxu0 0
    %304 = vmatpush1.bf16.msra.mxu0 0
    %305 = vmatprep.subr.bf16.mxu0 0
    %306 = vmatpush1.bf16.msra.mxu0 0
    %307 = vmatprep.subr.bf16.mxu0 0
    %308 = vmatpush1.bf16.msra.mxu0 0
    %309 = vmatprep.subr.bf16.mxu0 0
    %310 = vmatpush1.bf16.msra.mxu0 0
    %311 = vmatprep.subr.bf16.mxu0 0
    %312 = vmatpush1.bf16.msra.mxu0 0
    %313 = vmatprep.subr.bf16.mxu0 0
    %314 = vmatpush1.bf16.msra.mxu0 0
    %315 = vmatprep.subr.bf16.mxu0 0
    %316 = vmatpush1.bf16.msra.mxu0 0
    %317 = vmatprep.subr.bf16.mxu0 0
    %318 = vmatpush1.bf16.msra.mxu0 0
    %319 = vmatprep.subr.bf16.mxu0 0
    %320 = vmatpush1.bf16.msra.mxu0 0
    %321 = vmatprep.subr.bf16.mxu0 0
    %322 = vmatpush1.bf16.msra.mxu0 0
    %323 = vmatprep.subr.bf16.mxu0 0
    %324 = vmatpush1.bf16.msra.mxu0 0
    %325 = vmatprep.subr.bf16.mxu0 0
    %326 = vmatpush1.bf16.msra.mxu0 0
    %327 = vmatprep.subr.bf16.mxu0 0
    %328 = vmatpush1.bf16.msra.mxu0 0
    %329 = vmatprep.mubr.bf16.mxu0 0
    %330 = vmatmul.mubr.bf16.gmra.mrb[0].mxu0 %v188
    %v331 = vpop.f32.mrb[0].mxu0
    %v332 = vadd.f32 %v165, %v331
    %v333 = vpop.f32.mrb[0].mxu0
    %v334 = vadd.f32 %v169, %v333
    %v335 = vpop.f32.mrb[0].mxu0
    %v336 = vpop.f32.mrb[0].mxu0
    %337 = vdwg.mxu0
    %338 = vmatprep.subr.bf16.mxu0 %v112
    %339 = vmatpush1.bf16.msra.mxu0 %v111
    %340 = vmatprep.subr.bf16.mxu0 %v120
    %341 = vmatpush1.bf16.msra.mxu0 %v119
    %342 = vmatprep.subr.bf16.mxu0 %v213
    %343 = vmatpush1.bf16.msra.mxu0 %v210
    %344 = vmatprep.subr.bf16.mxu0 0
    %345 = vmatpush1.bf16.msra.mxu0 0
    %346 = vmatprep.subr.bf16.mxu0 0
    %347 = vmatpush1.bf16.msra.mxu0 0
    %348 = vmatprep.subr.bf16.mxu0 0
    %349 = vmatpush1.bf16.msra.mxu0 0
    %350 = vmatprep.subr.bf16.mxu0 0
    %351 = vmatpush1.bf16.msra.mxu0 0
    %352 = vmatprep.subr.bf16.mxu0 0
    %353 = vmatpush1.bf16.msra.mxu0 0
    %354 = vmatprep.subr.bf16.mxu0 0
    %355 = vmatpush1.bf16.msra.mxu0 0
    %356 = vmatprep.subr.bf16.mxu0 0
    %357 = vmatpush1.bf16.msra.mxu0 0
    %358 = vmatprep.subr.bf16.mxu0 0
    %359 = vmatpush1.bf16.msra.mxu0 0
    %360 = vmatprep.subr.bf16.mxu0 0
    %361 = vmatpush1.bf16.msra.mxu0 0
    %362 = vmatprep.subr.bf16.mxu0 0
    %363 = vmatpush1.bf16.msra.mxu0 0
    %364 = vmatprep.subr.bf16.mxu0 0
    %365 = vmatpush1.bf16.msra.mxu0 0
    %366 = vmatprep.subr.bf16.mxu0 0
    %367 = vmatpush1.bf16.msra.mxu0 0
    %368 = vmatprep.subr.bf16.mxu0 0
    %369 = vmatpush1.bf16.msra.mxu0 0
    %370 = vmatprep.mubr.bf16.mxu0 0
    %371 = vmatmul.mubr.bf16.gmra.mrb[0].mxu0 %v188
    %v372 = vpop.f32.mrb[0].mxu0
    %v373 = vadd.f32 %v173, %v372
    %v374 = vpop.f32.mrb[0].mxu0
    %v375 = vadd.f32 %v177, %v374
    %v376 = vpop.f32.mrb[0].mxu0
    %v377 = vpop.f32.mrb[0].mxu0
    %378 = vdwg.mxu0
    %v379 = vxor.u32 %v250, 2147483648
    %v380 = vxor.u32 %v252, 2147483648
    %v381 = vxor.u32 %v291, 2147483648
    %v382 = vxor.u32 %v293, 2147483648
    %v383 = vxor.u32 %v332, 2147483648
    %v384 = vxor.u32 %v334, 2147483648
    %v385 = vxor.u32 %v373, 2147483648
    %v386 = vxor.u32 %v375, 2147483648
    %v387 = vmul.f32 %v379, 1.442695
    %v388 = vpow.pop %v387
    %v389 = vmul.f32 %v380, 1.442695
    %v390 = vpow.pop %v389
    %v391 = vmul.f32 %v381, 1.442695
    %v392 = vpow.pop %v391
    %v393 = vmul.f32 %v382, 1.442695
    %v394 = vpow.pop %v393
    %v395 = vmul.f32 %v383, 1.442695
    %v396 = vpow.pop %v395
    %v397 = vmul.f32 %v384, 1.442695
    %v398 = vpow.pop %v397
    %v399 = vmul.f32 %v385, 1.442695
    %v400 = vpow.pop %v399
    %v401 = vmul.f32 %v386, 1.442695
    %v402 = vpow.pop %v401
    %v403 = vadd.f32 %v388, 1.0
    %v404 = vadd.f32 %v390, 1.0
    %v405 = vadd.f32 %v392, 1.0
    %v406 = vadd.f32 %v394, 1.0
    %v407 = vadd.f32 %v396, 1.0
    %v408 = vadd.f32 %v398, 1.0
    %v409 = vadd.f32 %v400, 1.0
    %v410 = vadd.f32 %v402, 1.0
    %v411 = vrcp.pop %v403
    %v412 = vmul.f32 1.0, %v411
    %v413 = vrcp.pop %v404
    %v414 = vmul.f32 1.0, %v413
    %v415 = vrcp.pop %v405
    %v416 = vmul.f32 1.0, %v415
    %v417 = vrcp.pop %v406
    %v418 = vmul.f32 1.0, %v417
    %v419 = vrcp.pop %v407
    %v420 = vmul.f32 1.0, %v419
    %v421 = vrcp.pop %v408
    %v422 = vmul.f32 1.0, %v421
    %v423 = vrcp.pop %v409
    %v424 = vmul.f32 1.0, %v423
    %v425 = vrcp.pop %v410
    %v426 = vmul.f32 1.0, %v425
    %v427 = vpack.c.bf16 %v412, %v412
    %v428 = vpack.c.bf16 %v414, %v414
    %v429 = vpack.c.bf16 %v416, %v416
    %v430 = vpack.c.bf16 %v418, %v418
    %v431 = vpack.c.bf16 %v420, %v420
    %v432 = vpack.c.bf16 %v422, %v422
    %v433 = vpack.c.bf16 %v424, %v424
    %v434 = vpack.c.bf16 %v426, %v426
    %v435 = vld [vmem:[%s3] sm:$0xff]
    %v436 = vld [vmem:[%s3 + $0x8] sm:$0xff]
    %v437 = vld [vmem:[%s3 + $0x10] sm:$0xff]
    %v438 = vld [vmem:[%s3 + $0x18] sm:$0xff]
    %v439 = vld [vmem:[%s3 + $0x20] sm:$0xff]
    %v440 = vld [vmem:[%s3 + $0x28] sm:$0xff]
    %v441 = vld [vmem:[%s3 + $0x30] sm:$0xff]
    %v442 = vld [vmem:[%s3 + $0x38] sm:$0xff]
    %v443 = vld [vmem:[%s3 + $0x40] sm:$0xff]
    %v444 = vld [vmem:[%s3 + $0x48] sm:$0xff]
    %v445 = vld [vmem:[%s3 + $0x50] sm:$0xff]
    %v446 = vld [vmem:[%s3 + $0x58] sm:$0xff]
    %v447 = vld [vmem:[%s3 + $0x60] sm:$0xff]
    %v448 = vld [vmem:[%s3 + $0x68] sm:$0xff]
    %v449 = vld [vmem:[%s3 + $0x70] sm:$0xff]
    %v450 = vld [vmem:[%s3 + $0x78] sm:$0xff]
    %v451 = vld [vmem:[%s3 + $0x80] sm:$0xff]
    %v452 = vld [vmem:[%s3 + $0x88] sm:$0xff]
    %v453 = vld [vmem:[%s3 + $0x90] sm:$0xff]
    %v454 = vld [vmem:[%s3 + $0x98] sm:$0xff]
    %v455 = vld [vmem:[%s3 + $0xa0] sm:$0xff]
    %v456 = vld [vmem:[%s3 + $0xa8] sm:$0xff]
    %v457 = vld [vmem:[%s3 + $0xb0] sm:$0xff]
    %v458 = vld [vmem:[%s3 + $0xb8] sm:$0xff]
    %v459 = vld [vmem:[%s3 + $0xc0] sm:$0xff]
    %v460 = vld [vmem:[%s3 + $0xc8] sm:$0xff]
    %v461 = vld [vmem:[%s3 + $0xd0] sm:$0xff]
    %v462 = vld [vmem:[%s3 + $0xd8] sm:$0xff]
    %v463 = vld [vmem:[%s3 + $0xe0] sm:$0xff]
    %v464 = vld [vmem:[%s3 + $0xe8] sm:$0xff]
    %v465 = vld [vmem:[%s3 + $0xf0] sm:$0xff]
    %v466 = vld [vmem:[%s3 + $0xf8] sm:$0xff]
    %v467 = vld [vmem:[%s3 + $0x100] sm:$0xff]
    %v468 = vld [vmem:[%s3 + $0x108] sm:$0xff]
    %v469 = vld [vmem:[%s3 + $0x110] sm:$0xff]
    %v470 = vld [vmem:[%s3 + $0x118] sm:$0xff]
    %v471 = vld [vmem:[%s3 + $0x120] sm:$0xff]
    %v472 = vld [vmem:[%s3 + $0x128] sm:$0xff]
    %v473 = vld [vmem:[%s3 + $0x130] sm:$0xff]
    %v474 = vld [vmem:[%s3 + $0x138] sm:$0xff]
    %v475 = vld [vmem:[%s3 + $0x140] sm:$0xff]
    %v476 = vld [vmem:[%s3 + $0x148] sm:$0xff]
    %v477 = vld [vmem:[%s3 + $0x150] sm:$0xff]
    %v478 = vld [vmem:[%s3 + $0x158] sm:$0xff]
    %v479 = vld [vmem:[%s3 + $0x160] sm:$0xff]
    %v480 = vld [vmem:[%s3 + $0x168] sm:$0xff]
    %v481 = vld [vmem:[%s3 + $0x170] sm:$0xff]
    %v482 = vld [vmem:[%s3 + $0x178] sm:$0xff]
    %v483 = vld [vmem:[%s3 + $0x180] sm:$0xff]
    %v484 = vld [vmem:[%s3 + $0x188] sm:$0xff]
    %v485 = vld [vmem:[%s3 + $0x190] sm:$0xff]
    %v486 = vld [vmem:[%s3 + $0x198] sm:$0xff]
    %v487 = vld [vmem:[%s3 + $0x1a0] sm:$0xff]
    %v488 = vld [vmem:[%s3 + $0x1a8] sm:$0xff]
    %v489 = vld [vmem:[%s3 + $0x1b0] sm:$0xff]
    %v490 = vld [vmem:[%s3 + $0x1b8] sm:$0xff]
    %v491 = vld [vmem:[%s3 + $0x1c0] sm:$0xff]
    %v492 = vld [vmem:[%s3 + $0x1c8] sm:$0xff]
    %v493 = vld [vmem:[%s3 + $0x1d0] sm:$0xff]
    %v494 = vld [vmem:[%s3 + $0x1d8] sm:$0xff]
    %v495 = vld [vmem:[%s3 + $0x1e0] sm:$0xff]
    %v496 = vld [vmem:[%s3 + $0x1e8] sm:$0xff]
    %v497 = vld [vmem:[%s3 + $0x1f0] sm:$0xff]
    %v498 = vld [vmem:[%s3 + $0x1f8] sm:$0xff]
    %v499 = vld [vmem:[%s3 + $0x200] sm:$0xff]
    %v500 = vld [vmem:[%s3 + $0x208] sm:$0xff]
    %v501 = vld [vmem:[%s3 + $0x210] sm:$0xff]
    %v502 = vld [vmem:[%s3 + $0x218] sm:$0xff]
    %v503 = vld [vmem:[%s3 + $0x220] sm:$0xff]
    %v504 = vld [vmem:[%s3 + $0x228] sm:$0xff]
    %v505 = vld [vmem:[%s3 + $0x230] sm:$0xff]
    %v506 = vld [vmem:[%s3 + $0x238] sm:$0xff]
    %v507 = vld [vmem:[%s3 + $0x240] sm:$0xff]
    %v508 = vld [vmem:[%s3 + $0x248] sm:$0xff]
    %v509 = vld [vmem:[%s3 + $0x250] sm:$0xff]
    %v510 = vld [vmem:[%s3 + $0x258] sm:$0xff]
    %v511 = vld [vmem:[%s3 + $0x260] sm:$0xff]
    %v512 = vld [vmem:[%s3 + $0x268] sm:$0xff]
    %v513 = vld [vmem:[%s3 + $0x270] sm:$0xff]
    %v514 = vld [vmem:[%s3 + $0x278] sm:$0xff]
    %v516 = vpack.i.b16 %v427, %v427
    %v518 = vlaneseq
    %v519 = vshrl.u32 %v518, 7
    %v520 = vsub.s32 0, %v519
    %v521 = vrot.slane %v516, %v520
    %v523 = vpack.i.b16 %v428, %v428
    %v525 = vlaneseq
    %v526 = vshrl.u32 %v525, 7
    %v527 = vsub.s32 0, %v526
    %v528 = vrot.slane %v523, %v527
    %v530 = vpack.i.b16 %v429, %v429
    %v532 = vlaneseq
    %v533 = vshrl.u32 %v532, 7
    %v534 = vsub.s32 0, %v533
    %v535 = vrot.slane %v530, %v534
    %v537 = vpack.i.b16 %v430, %v430
    %v539 = vlaneseq
    %v540 = vshrl.u32 %v539, 7
    %v541 = vsub.s32 0, %v540
    %v542 = vrot.slane %v537, %v541
    %v544 = vpack.i.b16 %v431, %v431
    %v546 = vlaneseq
    %v547 = vshrl.u32 %v546, 7
    %v548 = vsub.s32 0, %v547
    %v549 = vrot.slane %v544, %v548
    %v551 = vpack.i.b16 %v432, %v432
    %v553 = vlaneseq
    %v554 = vshrl.u32 %v553, 7
    %v555 = vsub.s32 0, %v554
    %v556 = vrot.slane %v551, %v555
    %v558 = vpack.i.b16 %v433, %v433
    %v560 = vlaneseq
    %v561 = vshrl.u32 %v560, 7
    %v562 = vsub.s32 0, %v561
    %v563 = vrot.slane %v558, %v562
    %v565 = vpack.i.b16 %v434, %v434
    %v567 = vlaneseq
    %v568 = vshrl.u32 %v567, 7
    %v569 = vsub.s32 0, %v568
    %v570 = vrot.slane %v565, %v569
    %v579 = vunpack.c.l.b16 %v521
    %v580 = vunpack.c.l.b16 %v528
    %v581 = vunpack.c.l.b16 %v535
    %v582 = vunpack.c.l.b16 %v542
    %v583 = vunpack.c.l.b16 %v549
    %v584 = vunpack.c.l.b16 %v556
    %v585 = vunpack.c.l.b16 %v563
    %v586 = vunpack.c.l.b16 %v570
    %v587 = vpack.c.b16 %v580, %v579
    %v588 = vpack.c.b16 %v582, %v581
    %v589 = vpack.c.b16 %v584, %v583
    %v590 = vpack.c.b16 %v586, %v585
    %v595 = vmul.bf16 %v435, %v587
    %v596 = vmul.bf16 %v436, %v588
    %v597 = vmul.bf16 %v437, %v589
    %v598 = vmul.bf16 %v438, %v590
    %v599 = vmul.bf16 %v439, %v587
    %v600 = vmul.bf16 %v440, %v588
    %v601 = vmul.bf16 %v441, %v589
    %v602 = vmul.bf16 %v442, %v590
    %v603 = vmul.bf16 %v443, %v587
    %v604 = vmul.bf16 %v444, %v588
    %v605 = vmul.bf16 %v445, %v589
    %v606 = vmul.bf16 %v446, %v590
    %v607 = vmul.bf16 %v447, %v587
    %v608 = vmul.bf16 %v448, %v588
    %v609 = vmul.bf16 %v449, %v589
    %v610 = vmul.bf16 %v450, %v590
    %v611 = vmul.bf16 %v451, %v587
    %v612 = vmul.bf16 %v452, %v588
    %v613 = vmul.bf16 %v453, %v589
    %v614 = vmul.bf16 %v454, %v590
    %v615 = vmul.bf16 %v455, %v587
    %v616 = vmul.bf16 %v456, %v588
    %v617 = vmul.bf16 %v457, %v589
    %v618 = vmul.bf16 %v458, %v590
    %v619 = vmul.bf16 %v459, %v587
    %v620 = vmul.bf16 %v460, %v588
    %v621 = vmul.bf16 %v461, %v589
    %v622 = vmul.bf16 %v462, %v590
    %v623 = vmul.bf16 %v463, %v587
    %v624 = vmul.bf16 %v464, %v588
    %v625 = vmul.bf16 %v465, %v589
    %v626 = vmul.bf16 %v466, %v590
    %v627 = vmul.bf16 %v467, %v587
    %v628 = vmul.bf16 %v468, %v588
    %v629 = vmul.bf16 %v469, %v589
    %v630 = vmul.bf16 %v470, %v590
    %v631 = vmul.bf16 %v471, %v587
    %v632 = vmul.bf16 %v472, %v588
    %v633 = vmul.bf16 %v473, %v589
    %v634 = vmul.bf16 %v474, %v590
    %v635 = vmul.bf16 %v475, %v587
    %v636 = vmul.bf16 %v476, %v588
    %v637 = vmul.bf16 %v477, %v589
    %v638 = vmul.bf16 %v478, %v590
    %v639 = vmul.bf16 %v479, %v587
    %v640 = vmul.bf16 %v480, %v588
    %v641 = vmul.bf16 %v481, %v589
    %v642 = vmul.bf16 %v482, %v590
    %v643 = vmul.bf16 %v483, %v587
    %v644 = vmul.bf16 %v484, %v588
    %v645 = vmul.bf16 %v485, %v589
    %v646 = vmul.bf16 %v486, %v590
    %v647 = vmul.bf16 %v487, %v587
    %v648 = vmul.bf16 %v488, %v588
    %v649 = vmul.bf16 %v489, %v589
    %v650 = vmul.bf16 %v490, %v590
    %v651 = vmul.bf16 %v491, %v587
    %v652 = vmul.bf16 %v492, %v588
    %v653 = vmul.bf16 %v493, %v589
    %v654 = vmul.bf16 %v494, %v590
    %v655 = vmul.bf16 %v495, %v587
    %v656 = vmul.bf16 %v496, %v588
    %v657 = vmul.bf16 %v497, %v589
    %v658 = vmul.bf16 %v498, %v590
    %v659 = vmul.bf16 %v499, %v587
    %v660 = vmul.bf16 %v500, %v588
    %v661 = vmul.bf16 %v501, %v589
    %v662 = vmul.bf16 %v502, %v590
    %v663 = vmul.bf16 %v503, %v587
    %v664 = vmul.bf16 %v504, %v588
    %v665 = vmul.bf16 %v505, %v589
    %v666 = vmul.bf16 %v506, %v590
    %v667 = vmul.bf16 %v507, %v587
    %v668 = vmul.bf16 %v508, %v588
    %v669 = vmul.bf16 %v509, %v589
    %v670 = vmul.bf16 %v510, %v590
    %v671 = vmul.bf16 %v511, %v587
    %v672 = vmul.bf16 %v512, %v588
    %v673 = vmul.bf16 %v513, %v589
    %v674 = vmul.bf16 %v514, %v590
    %v675 = vld [vmem:[%s4] sm:$0xff]
    %v676 = vld [vmem:[%s4 + $0x8] sm:$0xff]
    %v677 = vld [vmem:[%s4 + $0x10] sm:$0xff]
    %v678 = vld [vmem:[%s4 + $0x18] sm:$0xff]
    %v679 = vld [vmem:[%s4 + $0x20] sm:$0xff]
    %v680 = vld [vmem:[%s4 + $0x28] sm:$0xff]
    %v681 = vld [vmem:[%s4 + $0x30] sm:$0xff]
    %v682 = vld [vmem:[%s4 + $0x38] sm:$0xff]
    %v683 = vld [vmem:[%s4 + $0x40] sm:$0xff]
    %v684 = vld [vmem:[%s4 + $0x48] sm:$0xff]
    %v685 = vld [vmem:[%s4 + $0x50] sm:$0xff]
    %v686 = vld [vmem:[%s4 + $0x58] sm:$0xff]
    %v687 = vld [vmem:[%s4 + $0x60] sm:$0xff]
    %v688 = vld [vmem:[%s4 + $0x68] sm:$0xff]
    %v689 = vld [vmem:[%s4 + $0x70] sm:$0xff]
    %v690 = vld [vmem:[%s4 + $0x78] sm:$0xff]
    %v691 = vld [vmem:[%s4 + $0x80] sm:$0xff]
    %v692 = vld [vmem:[%s4 + $0x88] sm:$0xff]
    %v693 = vld [vmem:[%s4 + $0x90] sm:$0xff]
    %v694 = vld [vmem:[%s4 + $0x98] sm:$0xff]
    %v695 = vld [vmem:[%s4 + $0xa0] sm:$0xff]
    %v696 = vld [vmem:[%s4 + $0xa8] sm:$0xff]
    %v697 = vld [vmem:[%s4 + $0xb0] sm:$0xff]
    %v698 = vld [vmem:[%s4 + $0xb8] sm:$0xff]
    %v699 = vld [vmem:[%s4 + $0xc0] sm:$0xff]
    %v700 = vld [vmem:[%s4 + $0xc8] sm:$0xff]
    %v701 = vld [vmem:[%s4 + $0xd0] sm:$0xff]
    %v702 = vld [vmem:[%s4 + $0xd8] sm:$0xff]
    %v703 = vld [vmem:[%s4 + $0xe0] sm:$0xff]
    %v704 = vld [vmem:[%s4 + $0xe8] sm:$0xff]
    %v705 = vld [vmem:[%s4 + $0xf0] sm:$0xff]
    %v706 = vld [vmem:[%s4 + $0xf8] sm:$0xff]
    %v707 = vld [vmem:[%s4 + $0x100] sm:$0xff]
    %v708 = vld [vmem:[%s4 + $0x108] sm:$0xff]
    %v709 = vld [vmem:[%s4 + $0x110] sm:$0xff]
    %v710 = vld [vmem:[%s4 + $0x118] sm:$0xff]
    %v711 = vld [vmem:[%s4 + $0x120] sm:$0xff]
    %v712 = vld [vmem:[%s4 + $0x128] sm:$0xff]
    %v713 = vld [vmem:[%s4 + $0x130] sm:$0xff]
    %v714 = vld [vmem:[%s4 + $0x138] sm:$0xff]
    %v715 = vld [vmem:[%s4 + $0x140] sm:$0xff]
    %v716 = vld [vmem:[%s4 + $0x148] sm:$0xff]
    %v717 = vld [vmem:[%s4 + $0x150] sm:$0xff]
    %v718 = vld [vmem:[%s4 + $0x158] sm:$0xff]
    %v719 = vld [vmem:[%s4 + $0x160] sm:$0xff]
    %v720 = vld [vmem:[%s4 + $0x168] sm:$0xff]
    %v721 = vld [vmem:[%s4 + $0x170] sm:$0xff]
    %v722 = vld [vmem:[%s4 + $0x178] sm:$0xff]
    %v723 = vld [vmem:[%s4 + $0x180] sm:$0xff]
    %v724 = vld [vmem:[%s4 + $0x188] sm:$0xff]
    %v725 = vld [vmem:[%s4 + $0x190] sm:$0xff]
    %v726 = vld [vmem:[%s4 + $0x198] sm:$0xff]
    %v727 = vld [vmem:[%s4 + $0x1a0] sm:$0xff]
    %v728 = vld [vmem:[%s4 + $0x1a8] sm:$0xff]
    %v729 = vld [vmem:[%s4 + $0x1b0] sm:$0xff]
    %v730 = vld [vmem:[%s4 + $0x1b8] sm:$0xff]
    %v731 = vld [vmem:[%s4 + $0x1c0] sm:$0xff]
    %v732 = vld [vmem:[%s4 + $0x1c8] sm:$0xff]
    %v733 = vld [vmem:[%s4 + $0x1d0] sm:$0xff]
    %v734 = vld [vmem:[%s4 + $0x1d8] sm:$0xff]
    %v735 = vld [vmem:[%s4 + $0x1e0] sm:$0xff]
    %v736 = vld [vmem:[%s4 + $0x1e8] sm:$0xff]
    %v737 = vld [vmem:[%s4 + $0x1f0] sm:$0xff]
    %v738 = vld [vmem:[%s4 + $0x1f8] sm:$0xff]
    %v739 = vld [vmem:[%s4 + $0x200] sm:$0xff]
    %v740 = vld [vmem:[%s4 + $0x208] sm:$0xff]
    %v741 = vld [vmem:[%s4 + $0x210] sm:$0xff]
    %v742 = vld [vmem:[%s4 + $0x218] sm:$0xff]
    %v743 = vld [vmem:[%s4 + $0x220] sm:$0xff]
    %v744 = vld [vmem:[%s4 + $0x228] sm:$0xff]
    %v745 = vld [vmem:[%s4 + $0x230] sm:$0xff]
    %v746 = vld [vmem:[%s4 + $0x238] sm:$0xff]
    %v747 = vld [vmem:[%s4 + $0x240] sm:$0xff]
    %v748 = vld [vmem:[%s4 + $0x248] sm:$0xff]
    %v749 = vld [vmem:[%s4 + $0x250] sm:$0xff]
    %v750 = vld [vmem:[%s4 + $0x258] sm:$0xff]
    %v751 = vld [vmem:[%s4 + $0x260] sm:$0xff]
    %v752 = vld [vmem:[%s4 + $0x268] sm:$0xff]
    %v753 = vld [vmem:[%s4 + $0x270] sm:$0xff]
    %v754 = vld [vmem:[%s4 + $0x278] sm:$0xff]
    %v755 = vld [vmem:[%s4 + $0x280] sm:$0xff]
    %v756 = vld [vmem:[%s4 + $0x288] sm:$0xff]
    %v757 = vld [vmem:[%s4 + $0x290] sm:$0xff]
    %v758 = vld [vmem:[%s4 + $0x298] sm:$0xff]
    %v759 = vld [vmem:[%s4 + $0x2a0] sm:$0xff]
    %v760 = vld [vmem:[%s4 + $0x2a8] sm:$0xff]
    %v761 = vld [vmem:[%s4 + $0x2b0] sm:$0xff]
    %v762 = vld [vmem:[%s4 + $0x2b8] sm:$0xff]
    %v763 = vld [vmem:[%s4 + $0x2c0] sm:$0xff]
    %v764 = vld [vmem:[%s4 + $0x2c8] sm:$0xff]
    %v765 = vld [vmem:[%s4 + $0x2d0] sm:$0xff]
    %v766 = vld [vmem:[%s4 + $0x2d8] sm:$0xff]
    %v767 = vld [vmem:[%s4 + $0x2e0] sm:$0xff]
    %v768 = vld [vmem:[%s4 + $0x2e8] sm:$0xff]
    %v769 = vld [vmem:[%s4 + $0x2f0] sm:$0xff]
    %v770 = vld [vmem:[%s4 + $0x2f8] sm:$0xff]
    %v771 = vld [vmem:[%s4 + $0x300] sm:$0xff]
    %v772 = vld [vmem:[%s4 + $0x308] sm:$0xff]
    %v773 = vld [vmem:[%s4 + $0x310] sm:$0xff]
    %v774 = vld [vmem:[%s4 + $0x318] sm:$0xff]
    %v775 = vld [vmem:[%s4 + $0x320] sm:$0xff]
    %v776 = vld [vmem:[%s4 + $0x328] sm:$0xff]
    %v777 = vld [vmem:[%s4 + $0x330] sm:$0xff]
    %v778 = vld [vmem:[%s4 + $0x338] sm:$0xff]
    %v779 = vld [vmem:[%s4 + $0x340] sm:$0xff]
    %v780 = vld [vmem:[%s4 + $0x348] sm:$0xff]
    %v781 = vld [vmem:[%s4 + $0x350] sm:$0xff]
    %v782 = vld [vmem:[%s4 + $0x358] sm:$0xff]
    %v783 = vld [vmem:[%s4 + $0x360] sm:$0xff]
    %v784 = vld [vmem:[%s4 + $0x368] sm:$0xff]
    %v785 = vld [vmem:[%s4 + $0x370] sm:$0xff]
    %v786 = vld [vmem:[%s4 + $0x378] sm:$0xff]
    %v787 = vld [vmem:[%s4 + $0x380] sm:$0xff]
    %v788 = vld [vmem:[%s4 + $0x388] sm:$0xff]
    %v789 = vld [vmem:[%s4 + $0x390] sm:$0xff]
    %v790 = vld [vmem:[%s4 + $0x398] sm:$0xff]
    %v791 = vld [vmem:[%s4 + $0x3a0] sm:$0xff]
    %v792 = vld [vmem:[%s4 + $0x3a8] sm:$0xff]
    %v793 = vld [vmem:[%s4 + $0x3b0] sm:$0xff]
    %v794 = vld [vmem:[%s4 + $0x3b8] sm:$0xff]
    %v795 = vld [vmem:[%s4 + $0x3c0] sm:$0xff]
    %v796 = vld [vmem:[%s4 + $0x3c8] sm:$0xff]
    %v797 = vld [vmem:[%s4 + $0x3d0] sm:$0xff]
    %v798 = vld [vmem:[%s4 + $0x3d8] sm:$0xff]
    %v799 = vld [vmem:[%s4 + $0x3e0] sm:$0xff]
    %v800 = vld [vmem:[%s4 + $0x3e8] sm:$0xff]
    %v801 = vld [vmem:[%s4 + $0x3f0] sm:$0xff]
    %v802 = vld [vmem:[%s4 + $0x3f8] sm:$0xff]
    %v803 = vld [vmem:[%s4 + $0x400] sm:$0xff]
    %v804 = vld [vmem:[%s4 + $0x408] sm:$0xff]
    %v805 = vld [vmem:[%s4 + $0x410] sm:$0xff]
    %v806 = vld [vmem:[%s4 + $0x418] sm:$0xff]
    %v807 = vld [vmem:[%s4 + $0x420] sm:$0xff]
    %v808 = vld [vmem:[%s4 + $0x428] sm:$0xff]
    %v809 = vld [vmem:[%s4 + $0x430] sm:$0xff]
    %v810 = vld [vmem:[%s4 + $0x438] sm:$0xff]
    %v811 = vld [vmem:[%s4 + $0x440] sm:$0xff]
    %v812 = vld [vmem:[%s4 + $0x448] sm:$0xff]
    %v813 = vld [vmem:[%s4 + $0x450] sm:$0xff]
    %v814 = vld [vmem:[%s4 + $0x458] sm:$0xff]
    %v815 = vld [vmem:[%s4 + $0x460] sm:$0xff]
    %v816 = vld [vmem:[%s4 + $0x468] sm:$0xff]
    %v817 = vld [vmem:[%s4 + $0x470] sm:$0xff]
    %v818 = vld [vmem:[%s4 + $0x478] sm:$0xff]
    %v819 = vld [vmem:[%s4 + $0x480] sm:$0xff]
    %v820 = vld [vmem:[%s4 + $0x488] sm:$0xff]
    %v821 = vld [vmem:[%s4 + $0x490] sm:$0xff]
    %v822 = vld [vmem:[%s4 + $0x498] sm:$0xff]
    %v823 = vld [vmem:[%s4 + $0x4a0] sm:$0xff]
    %v824 = vld [vmem:[%s4 + $0x4a8] sm:$0xff]
    %v825 = vld [vmem:[%s4 + $0x4b0] sm:$0xff]
    %v826 = vld [vmem:[%s4 + $0x4b8] sm:$0xff]
    %v827 = vld [vmem:[%s4 + $0x4c0] sm:$0xff]
    %v828 = vld [vmem:[%s4 + $0x4c8] sm:$0xff]
    %v829 = vld [vmem:[%s4 + $0x4d0] sm:$0xff]
    %v830 = vld [vmem:[%s4 + $0x4d8] sm:$0xff]
    %v831 = vld [vmem:[%s4 + $0x4e0] sm:$0xff]
    %v832 = vld [vmem:[%s4 + $0x4e8] sm:$0xff]
    %v833 = vld [vmem:[%s4 + $0x4f0] sm:$0xff]
    %v834 = vld [vmem:[%s4 + $0x4f8] sm:$0xff]
    %v835 = vld [vmem:[%s4 + $0x500] sm:$0xff]
    %v836 = vld [vmem:[%s4 + $0x508] sm:$0xff]
    %v837 = vld [vmem:[%s4 + $0x510] sm:$0xff]
    %v838 = vld [vmem:[%s4 + $0x518] sm:$0xff]
    %v839 = vld [vmem:[%s4 + $0x520] sm:$0xff]
    %v840 = vld [vmem:[%s4 + $0x528] sm:$0xff]
    %v841 = vld [vmem:[%s4 + $0x530] sm:$0xff]
    %v842 = vld [vmem:[%s4 + $0x538] sm:$0xff]
    %v843 = vld [vmem:[%s4 + $0x540] sm:$0xff]
    %v844 = vld [vmem:[%s4 + $0x548] sm:$0xff]
    %v845 = vld [vmem:[%s4 + $0x550] sm:$0xff]
    %v846 = vld [vmem:[%s4 + $0x558] sm:$0xff]
    %v847 = vld [vmem:[%s4 + $0x560] sm:$0xff]
    %v848 = vld [vmem:[%s4 + $0x568] sm:$0xff]
    %v849 = vld [vmem:[%s4 + $0x570] sm:$0xff]
    %v850 = vld [vmem:[%s4 + $0x578] sm:$0xff]
    %v851 = vld [vmem:[%s4 + $0x580] sm:$0xff]
    %v852 = vld [vmem:[%s4 + $0x588] sm:$0xff]
    %v853 = vld [vmem:[%s4 + $0x590] sm:$0xff]
    %v854 = vld [vmem:[%s4 + $0x598] sm:$0xff]
    %v855 = vld [vmem:[%s4 + $0x5a0] sm:$0xff]
    %v856 = vld [vmem:[%s4 + $0x5a8] sm:$0xff]
    %v857 = vld [vmem:[%s4 + $0x5b0] sm:$0xff]
    %v858 = vld [vmem:[%s4 + $0x5b8] sm:$0xff]
    %v859 = vld [vmem:[%s4 + $0x5c0] sm:$0xff]
    %v860 = vld [vmem:[%s4 + $0x5c8] sm:$0xff]
    %v861 = vld [vmem:[%s4 + $0x5d0] sm:$0xff]
    %v862 = vld [vmem:[%s4 + $0x5d8] sm:$0xff]
    %v863 = vld [vmem:[%s4 + $0x5e0] sm:$0xff]
    %v864 = vld [vmem:[%s4 + $0x5e8] sm:$0xff]
    %v865 = vld [vmem:[%s4 + $0x5f0] sm:$0xff]
    %v866 = vld [vmem:[%s4 + $0x5f8] sm:$0xff]
    %v867 = vld [vmem:[%s4 + $0x600] sm:$0xff]
    %v868 = vld [vmem:[%s4 + $0x608] sm:$0xff]
    %v869 = vld [vmem:[%s4 + $0x610] sm:$0xff]
    %v870 = vld [vmem:[%s4 + $0x618] sm:$0xff]
    %v871 = vld [vmem:[%s4 + $0x620] sm:$0xff]
    %v872 = vld [vmem:[%s4 + $0x628] sm:$0xff]
    %v873 = vld [vmem:[%s4 + $0x630] sm:$0xff]
    %v874 = vld [vmem:[%s4 + $0x638] sm:$0xff]
    %v875 = vld [vmem:[%s4 + $0x640] sm:$0xff]
    %v876 = vld [vmem:[%s4 + $0x648] sm:$0xff]
    %v877 = vld [vmem:[%s4 + $0x650] sm:$0xff]
    %v878 = vld [vmem:[%s4 + $0x658] sm:$0xff]
    %v879 = vld [vmem:[%s4 + $0x660] sm:$0xff]
    %v880 = vld [vmem:[%s4 + $0x668] sm:$0xff]
    %v881 = vld [vmem:[%s4 + $0x670] sm:$0xff]
    %v882 = vld [vmem:[%s4 + $0x678] sm:$0xff]
    %v883 = vld [vmem:[%s4 + $0x680] sm:$0xff]
    %v884 = vld [vmem:[%s4 + $0x688] sm:$0xff]
    %v885 = vld [vmem:[%s4 + $0x690] sm:$0xff]
    %v886 = vld [vmem:[%s4 + $0x698] sm:$0xff]
    %v887 = vld [vmem:[%s4 + $0x6a0] sm:$0xff]
    %v888 = vld [vmem:[%s4 + $0x6a8] sm:$0xff]
    %v889 = vld [vmem:[%s4 + $0x6b0] sm:$0xff]
    %v890 = vld [vmem:[%s4 + $0x6b8] sm:$0xff]
    %v891 = vld [vmem:[%s4 + $0x6c0] sm:$0xff]
    %v892 = vld [vmem:[%s4 + $0x6c8] sm:$0xff]
    %v893 = vld [vmem:[%s4 + $0x6d0] sm:$0xff]
    %v894 = vld [vmem:[%s4 + $0x6d8] sm:$0xff]
    %v895 = vld [vmem:[%s4 + $0x6e0] sm:$0xff]
    %v896 = vld [vmem:[%s4 + $0x6e8] sm:$0xff]
    %v897 = vld [vmem:[%s4 + $0x6f0] sm:$0xff]
    %v898 = vld [vmem:[%s4 + $0x6f8] sm:$0xff]
    %v899 = vld [vmem:[%s4 + $0x700] sm:$0xff]
    %v900 = vld [vmem:[%s4 + $0x708] sm:$0xff]
    %v901 = vld [vmem:[%s4 + $0x710] sm:$0xff]
    %v902 = vld [vmem:[%s4 + $0x718] sm:$0xff]
    %v903 = vld [vmem:[%s4 + $0x720] sm:$0xff]
    %v904 = vld [vmem:[%s4 + $0x728] sm:$0xff]
    %v905 = vld [vmem:[%s4 + $0x730] sm:$0xff]
    %v906 = vld [vmem:[%s4 + $0x738] sm:$0xff]
    %v907 = vld [vmem:[%s4 + $0x740] sm:$0xff]
    %v908 = vld [vmem:[%s4 + $0x748] sm:$0xff]
    %v909 = vld [vmem:[%s4 + $0x750] sm:$0xff]
    %v910 = vld [vmem:[%s4 + $0x758] sm:$0xff]
    %v911 = vld [vmem:[%s4 + $0x760] sm:$0xff]
    %v912 = vld [vmem:[%s4 + $0x768] sm:$0xff]
    %v913 = vld [vmem:[%s4 + $0x770] sm:$0xff]
    %v914 = vld [vmem:[%s4 + $0x778] sm:$0xff]
    %v915 = vpack.c.bf16 %v677, %v675
    %v916 = vpack.c.bf16 %v678, %v676
    %v917 = vpack.c.bf16 %v681, %v679
    %v918 = vpack.c.bf16 %v682, %v680
    %v919 = vpack.c.bf16 %v685, %v683
    %v920 = vpack.c.bf16 %v686, %v684
    %v921 = vpack.c.bf16 %v689, %v687
    %v922 = vpack.c.bf16 %v690, %v688
    %v923 = vpack.c.bf16 %v693, %v691
    %v924 = vpack.c.bf16 %v694, %v692
    %v925 = vpack.c.bf16 %v697, %v695
    %v926 = vpack.c.bf16 %v698, %v696
    %v927 = vpack.c.bf16 %v701, %v699
    %v928 = vpack.c.bf16 %v702, %v700
    %v929 = vpack.c.bf16 %v705, %v703
    %v930 = vpack.c.bf16 %v706, %v704
    %v931 = vpack.c.bf16 %v709, %v707
    %v932 = vpack.c.bf16 %v710, %v708
    %v933 = vpack.c.bf16 %v713, %v711
    %v934 = vpack.c.bf16 %v714, %v712
    %v935 = vpack.c.bf16 %v717, %v715
    %v936 = vpack.c.bf16 %v718, %v716
    %v937 = vpack.c.bf16 %v721, %v719
    %v938 = vpack.c.bf16 %v722, %v720
    %v939 = vpack.c.bf16 %v725, %v723
    %v940 = vpack.c.bf16 %v726, %v724
    %v941 = vpack.c.bf16 %v729, %v727
    %v942 = vpack.c.bf16 %v730, %v728
    %v943 = vpack.c.bf16 %v733, %v731
    %v944 = vpack.c.bf16 %v734, %v732
    %v945 = vpack.c.bf16 %v737, %v735
    %v946 = vpack.c.bf16 %v738, %v736
    %v947 = vpack.c.bf16 %v741, %v739
    %v948 = vpack.c.bf16 %v742, %v740
    %v949 = vpack.c.bf16 %v745, %v743
    %v950 = vpack.c.bf16 %v746, %v744
    %v951 = vpack.c.bf16 %v749, %v747
    %v952 = vpack.c.bf16 %v750, %v748
    %v953 = vpack.c.bf16 %v753, %v751
    %v954 = vpack.c.bf16 %v754, %v752
    %v955 = vpack.c.bf16 %v757, %v755
    %v956 = vpack.c.bf16 %v758, %v756
    %v957 = vpack.c.bf16 %v761, %v759
    %v958 = vpack.c.bf16 %v762, %v760
    %v959 = vpack.c.bf16 %v765, %v763
    %v960 = vpack.c.bf16 %v766, %v764
    %v961 = vpack.c.bf16 %v769, %v767
    %v962 = vpack.c.bf16 %v770, %v768
    %v963 = vpack.c.bf16 %v773, %v771
    %v964 = vpack.c.bf16 %v774, %v772
    %v965 = vpack.c.bf16 %v777, %v775
    %v966 = vpack.c.bf16 %v778, %v776
    %v967 = vpack.c.bf16 %v781, %v779
    %v968 = vpack.c.bf16 %v782, %v780
    %v969 = vpack.c.bf16 %v785, %v783
    %v970 = vpack.c.bf16 %v786, %v784
    %v971 = vpack.c.bf16 %v789, %v787
    %v972 = vpack.c.bf16 %v790, %v788
    %v973 = vpack.c.bf16 %v793, %v791
    %v974 = vpack.c.bf16 %v794, %v792
    %v975 = vpack.c.bf16 %v797, %v795
    %v976 = vpack.c.bf16 %v798, %v796
    %v977 = vpack.c.bf16 %v801, %v799
    %v978 = vpack.c.bf16 %v802, %v800
    %v979 = vpack.c.bf16 %v805, %v803
    %v980 = vpack.c.bf16 %v806, %v804
    %v981 = vpack.c.bf16 %v809, %v807
    %v982 = vpack.c.bf16 %v810, %v808
    %v983 = vpack.c.bf16 %v813, %v811
    %v984 = vpack.c.bf16 %v814, %v812
    %v985 = vpack.c.bf16 %v817, %v815
    %v986 = vpack.c.bf16 %v818, %v816
    %v987 = vpack.c.bf16 %v821, %v819
    %v988 = vpack.c.bf16 %v822, %v820
    %v989 = vpack.c.bf16 %v825, %v823
    %v990 = vpack.c.bf16 %v826, %v824
    %v991 = vpack.c.bf16 %v829, %v827
    %v992 = vpack.c.bf16 %v830, %v828
    %v993 = vpack.c.bf16 %v833, %v831
    %v994 = vpack.c.bf16 %v834, %v832
    %v995 = vpack.c.bf16 %v837, %v835
    %v996 = vpack.c.bf16 %v838, %v836
    %v997 = vpack.c.bf16 %v841, %v839
    %v998 = vpack.c.bf16 %v842, %v840
    %v999 = vpack.c.bf16 %v845, %v843
    %v1000 = vpack.c.bf16 %v846, %v844
    %v1001 = vpack.c.bf16 %v849, %v847
    %v1002 = vpack.c.bf16 %v850, %v848
    %v1003 = vpack.c.bf16 %v853, %v851
    %v1004 = vpack.c.bf16 %v854, %v852
    %v1005 = vpack.c.bf16 %v857, %v855
    %v1006 = vpack.c.bf16 %v858, %v856
    %v1007 = vpack.c.bf16 %v861, %v859
    %v1008 = vpack.c.bf16 %v862, %v860
    %v1009 = vpack.c.bf16 %v865, %v863
    %v1010 = vpack.c.bf16 %v866, %v864
    %v1011 = vpack.c.bf16 %v869, %v867
    %v1012 = vpack.c.bf16 %v870, %v868
    %v1013 = vpack.c.bf16 %v873, %v871
    %v1014 = vpack.c.bf16 %v874, %v872
    %v1015 = vpack.c.bf16 %v877, %v875
    %v1016 = vpack.c.bf16 %v878, %v876
    %v1017 = vpack.c.bf16 %v881, %v879
    %v1018 = vpack.c.bf16 %v882, %v880
    %v1019 = vpack.c.bf16 %v885, %v883
    %v1020 = vpack.c.bf16 %v886, %v884
    %v1021 = vpack.c.bf16 %v889, %v887
    %v1022 = vpack.c.bf16 %v890, %v888
    %v1023 = vpack.c.bf16 %v893, %v891
    %v1024 = vpack.c.bf16 %v894, %v892
    %v1025 = vpack.c.bf16 %v897, %v895
    %v1026 = vpack.c.bf16 %v898, %v896
    %v1027 = vpack.c.bf16 %v901, %v899
    %v1028 = vpack.c.bf16 %v902, %v900
    %v1029 = vpack.c.bf16 %v905, %v903
    %v1030 = vpack.c.bf16 %v906, %v904
    %v1031 = vpack.c.bf16 %v909, %v907
    %v1032 = vpack.c.bf16 %v910, %v908
    %v1033 = vpack.c.bf16 %v913, %v911
    %v1034 = vpack.c.bf16 %v914, %v912
    %v1115 = vunpack.c.l.b16 %v595
    %v1116 = vunpack.c.h.b16 %v595
    %v1117 = vunpack.c.l.b16 %v596
    %v1118 = vunpack.c.h.b16 %v596
    %v1119 = vunpack.c.l.b16 %v597
    %v1120 = vunpack.c.h.b16 %v597
    %v1121 = vunpack.c.l.b16 %v598
    %v1122 = vunpack.c.h.b16 %v598
    %v1123 = vunpack.c.l.b16 %v599
    %v1124 = vunpack.c.h.b16 %v599
    %v1125 = vunpack.c.l.b16 %v600
    %v1126 = vunpack.c.h.b16 %v600
    %v1127 = vunpack.c.l.b16 %v601
    %v1128 = vunpack.c.h.b16 %v601
    %v1129 = vunpack.c.l.b16 %v602
    %v1130 = vunpack.c.h.b16 %v602
    %v1131 = vunpack.c.l.b16 %v603
    %v1132 = vunpack.c.h.b16 %v603
    %v1133 = vunpack.c.l.b16 %v604
    %v1134 = vunpack.c.h.b16 %v604
    %v1135 = vunpack.c.l.b16 %v605
    %v1136 = vunpack.c.h.b16 %v605
    %v1137 = vunpack.c.l.b16 %v606
    %v1138 = vunpack.c.h.b16 %v606
    %v1139 = vunpack.c.l.b16 %v607
    %v1140 = vunpack.c.h.b16 %v607
    %v1141 = vunpack.c.l.b16 %v608
    %v1142 = vunpack.c.h.b16 %v608
    %v1143 = vunpack.c.l.b16 %v609
    %v1144 = vunpack.c.h.b16 %v609
    %v1145 = vunpack.c.l.b16 %v610
    %v1146 = vunpack.c.h.b16 %v610
    %v1147 = vunpack.c.l.b16 %v611
    %v1148 = vunpack.c.h.b16 %v611
    %v1149 = vunpack.c.l.b16 %v612
    %v1150 = vunpack.c.h.b16 %v612
    %v1151 = vunpack.c.l.b16 %v613
    %v1152 = vunpack.c.h.b16 %v613
    %v1153 = vunpack.c.l.b16 %v614
    %v1154 = vunpack.c.h.b16 %v614
    %v1155 = vunpack.c.l.b16 %v615
    %v1156 = vunpack.c.h.b16 %v615
    %v1157 = vunpack.c.l.b16 %v616
    %v1158 = vunpack.c.h.b16 %v616
    %v1159 = vunpack.c.l.b16 %v617
    %v1160 = vunpack.c.h.b16 %v617
    %v1161 = vunpack.c.l.b16 %v618
    %v1162 = vunpack.c.h.b16 %v618
    %v1163 = vunpack.c.l.b16 %v619
    %v1164 = vunpack.c.h.b16 %v619
    %v1165 = vunpack.c.l.b16 %v620
    %v1166 = vunpack.c.h.b16 %v620
    %v1167 = vunpack.c.l.b16 %v621
    %v1168 = vunpack.c.h.b16 %v621
    %v1169 = vunpack.c.l.b16 %v622
    %v1170 = vunpack.c.h.b16 %v622
    %v1171 = vunpack.c.l.b16 %v623
    %v1172 = vunpack.c.h.b16 %v623
    %v1173 = vunpack.c.l.b16 %v624
    %v1174 = vunpack.c.h.b16 %v624
    %v1175 = vunpack.c.l.b16 %v625
    %v1176 = vunpack.c.h.b16 %v625
    %v1177 = vunpack.c.l.b16 %v626
    %v1178 = vunpack.c.h.b16 %v626
    %v1179 = vunpack.c.l.b16 %v627
    %v1180 = vunpack.c.h.b16 %v627
    %v1181 = vunpack.c.l.b16 %v628
    %v1182 = vunpack.c.h.b16 %v628
    %v1183 = vunpack.c.l.b16 %v629
    %v1184 = vunpack.c.h.b16 %v629
    %v1185 = vunpack.c.l.b16 %v630
    %v1186 = vunpack.c.h.b16 %v630
    %v1187 = vunpack.c.l.b16 %v631
    %v1188 = vunpack.c.h.b16 %v631
    %v1189 = vunpack.c.l.b16 %v632
    %v1190 = vunpack.c.h.b16 %v632
    %v1191 = vunpack.c.l.b16 %v633
    %v1192 = vunpack.c.h.b16 %v633
    %v1193 = vunpack.c.l.b16 %v634
    %v1194 = vunpack.c.h.b16 %v634
    %v1195 = vunpack.c.l.b16 %v635
    %v1196 = vunpack.c.h.b16 %v635
    %v1197 = vunpack.c.l.b16 %v636
    %v1198 = vunpack.c.h.b16 %v636
    %v1199 = vunpack.c.l.b16 %v637
    %v1200 = vunpack.c.h.b16 %v637
    %v1201 = vunpack.c.l.b16 %v638
    %v1202 = vunpack.c.h.b16 %v638
    %v1203 = vunpack.c.l.b16 %v639
    %v1204 = vunpack.c.h.b16 %v639
    %v1205 = vunpack.c.l.b16 %v640
    %v1206 = vunpack.c.h.b16 %v640
    %v1207 = vunpack.c.l.b16 %v641
    %v1208 = vunpack.c.h.b16 %v641
    %v1209 = vunpack.c.l.b16 %v642
    %v1210 = vunpack.c.h.b16 %v642
    %v1211 = vunpack.c.l.b16 %v643
    %v1212 = vunpack.c.h.b16 %v643
    %v1213 = vunpack.c.l.b16 %v644
    %v1214 = vunpack.c.h.b16 %v644
    %v1215 = vunpack.c.l.b16 %v645
    %v1216 = vunpack.c.h.b16 %v645
    %v1217 = vunpack.c.l.b16 %v646
    %v1218 = vunpack.c.h.b16 %v646
    %v1219 = vunpack.c.l.b16 %v647
    %v1220 = vunpack.c.h.b16 %v647
    %v1221 = vunpack.c.l.b16 %v648
    %v1222 = vunpack.c.h.b16 %v648
    %v1223 = vunpack.c.l.b16 %v649
    %v1224 = vunpack.c.h.b16 %v649
    %v1225 = vunpack.c.l.b16 %v650
    %v1226 = vunpack.c.h.b16 %v650
    %v1227 = vunpack.c.l.b16 %v651
    %v1228 = vunpack.c.h.b16 %v651
    %v1229 = vunpack.c.l.b16 %v652
    %v1230 = vunpack.c.h.b16 %v652
    %v1231 = vunpack.c.l.b16 %v653
    %v1232 = vunpack.c.h.b16 %v653
    %v1233 = vunpack.c.l.b16 %v654
    %v1234 = vunpack.c.h.b16 %v654
    %v1235 = vunpack.c.l.b16 %v655
    %v1236 = vunpack.c.h.b16 %v655
    %v1237 = vunpack.c.l.b16 %v656
    %v1238 = vunpack.c.h.b16 %v656
    %v1239 = vunpack.c.l.b16 %v657
    %v1240 = vunpack.c.h.b16 %v657
    %v1241 = vunpack.c.l.b16 %v658
    %v1242 = vunpack.c.h.b16 %v658
    %v1243 = vunpack.c.l.b16 %v659
    %v1244 = vunpack.c.h.b16 %v659
    %v1245 = vunpack.c.l.b16 %v660
    %v1246 = vunpack.c.h.b16 %v660
    %v1247 = vunpack.c.l.b16 %v661
    %v1248 = vunpack.c.h.b16 %v661
    %v1249 = vunpack.c.l.b16 %v662
    %v1250 = vunpack.c.h.b16 %v662
    %v1251 = vunpack.c.l.b16 %v663
    %v1252 = vunpack.c.h.b16 %v663
    %v1253 = vunpack.c.l.b16 %v664
    %v1254 = vunpack.c.h.b16 %v664
    %v1255 = vunpack.c.l.b16 %v665
    %v1256 = vunpack.c.h.b16 %v665
    %v1257 = vunpack.c.l.b16 %v666
    %v1258 = vunpack.c.h.b16 %v666
    %v1259 = vunpack.c.l.b16 %v667
    %v1260 = vunpack.c.h.b16 %v667
    %v1261 = vunpack.c.l.b16 %v668
    %v1262 = vunpack.c.h.b16 %v668
    %v1263 = vunpack.c.l.b16 %v669
    %v1264 = vunpack.c.h.b16 %v669
    %v1265 = vunpack.c.l.b16 %v670
    %v1266 = vunpack.c.h.b16 %v670
    %v1267 = vunpack.c.l.b16 %v671
    %v1268 = vunpack.c.h.b16 %v671
    %v1269 = vunpack.c.l.b16 %v672
    %v1270 = vunpack.c.h.b16 %v672
    %v1271 = vunpack.c.l.b16 %v673
    %v1272 = vunpack.c.h.b16 %v673
    %v1273 = vunpack.c.l.b16 %v674
    %v1274 = vunpack.c.h.b16 %v674
    %v1275 = vpack.c.b16 %v1123, %v1115
    %v1276 = vpack.c.b16 %v1124, %v1116
    %v1277 = vpack.c.b16 %v1125, %v1117
    %v1278 = vpack.c.b16 %v1126, %v1118
    %v1279 = vpack.c.b16 %v1127, %v1119
    %v1280 = vpack.c.b16 %v1128, %v1120
    %v1281 = vpack.c.b16 %v1129, %v1121
    %v1282 = vpack.c.b16 %v1130, %v1122
    %v1283 = vpack.c.b16 %v1139, %v1131
    %v1284 = vpack.c.b16 %v1140, %v1132
    %v1285 = vpack.c.b16 %v1141, %v1133
    %v1286 = vpack.c.b16 %v1142, %v1134
    %v1287 = vpack.c.b16 %v1143, %v1135
    %v1288 = vpack.c.b16 %v1144, %v1136
    %v1289 = vpack.c.b16 %v1145, %v1137
    %v1290 = vpack.c.b16 %v1146, %v1138
    %v1291 = vpack.c.b16 %v1155, %v1147
    %v1292 = vpack.c.b16 %v1156, %v1148
    %v1293 = vpack.c.b16 %v1157, %v1149
    %v1294 = vpack.c.b16 %v1158, %v1150
    %v1295 = vpack.c.b16 %v1159, %v1151
    %v1296 = vpack.c.b16 %v1160, %v1152
    %v1297 = vpack.c.b16 %v1161, %v1153
    %v1298 = vpack.c.b16 %v1162, %v1154
    %v1299 = vpack.c.b16 %v1171, %v1163
    %v1300 = vpack.c.b16 %v1172, %v1164
    %v1301 = vpack.c.b16 %v1173, %v1165
    %v1302 = vpack.c.b16 %v1174, %v1166
    %v1303 = vpack.c.b16 %v1175, %v1167
    %v1304 = vpack.c.b16 %v1176, %v1168
    %v1305 = vpack.c.b16 %v1177, %v1169
    %v1306 = vpack.c.b16 %v1178, %v1170
    %v1307 = vpack.c.b16 %v1187, %v1179
    %v1308 = vpack.c.b16 %v1188, %v1180
    %v1309 = vpack.c.b16 %v1189, %v1181
    %v1310 = vpack.c.b16 %v1190, %v1182
    %v1311 = vpack.c.b16 %v1191, %v1183
    %v1312 = vpack.c.b16 %v1192, %v1184
    %v1313 = vpack.c.b16 %v1193, %v1185
    %v1314 = vpack.c.b16 %v1194, %v1186
    %v1315 = vpack.c.b16 %v1203, %v1195
    %v1316 = vpack.c.b16 %v1204, %v1196
    %v1317 = vpack.c.b16 %v1205, %v1197
    %v1318 = vpack.c.b16 %v1206, %v1198
    %v1319 = vpack.c.b16 %v1207, %v1199
    %v1320 = vpack.c.b16 %v1208, %v1200
    %v1321 = vpack.c.b16 %v1209, %v1201
    %v1322 = vpack.c.b16 %v1210, %v1202
    %v1323 = vpack.c.b16 %v1219, %v1211
    %v1324 = vpack.c.b16 %v1220, %v1212
    %v1325 = vpack.c.b16 %v1221, %v1213
    %v1326 = vpack.c.b16 %v1222, %v1214
    %v1327 = vpack.c.b16 %v1223, %v1215
    %v1328 = vpack.c.b16 %v1224, %v1216
    %v1329 = vpack.c.b16 %v1225, %v1217
    %v1330 = vpack.c.b16 %v1226, %v1218
    %v1331 = vpack.c.b16 %v1235, %v1227
    %v1332 = vpack.c.b16 %v1236, %v1228
    %v1333 = vpack.c.b16 %v1237, %v1229
    %v1334 = vpack.c.b16 %v1238, %v1230
    %v1335 = vpack.c.b16 %v1239, %v1231
    %v1336 = vpack.c.b16 %v1240, %v1232
    %v1337 = vpack.c.b16 %v1241, %v1233
    %v1338 = vpack.c.b16 %v1242, %v1234
    %v1339 = vpack.c.b16 %v1251, %v1243
    %v1340 = vpack.c.b16 %v1252, %v1244
    %v1341 = vpack.c.b16 %v1253, %v1245
    %v1342 = vpack.c.b16 %v1254, %v1246
    %v1343 = vpack.c.b16 %v1255, %v1247
    %v1344 = vpack.c.b16 %v1256, %v1248
    %v1345 = vpack.c.b16 %v1257, %v1249
    %v1346 = vpack.c.b16 %v1258, %v1250
    %v1347 = vpack.c.b16 %v1267, %v1259
    %v1348 = vpack.c.b16 %v1268, %v1260
    %v1349 = vpack.c.b16 %v1269, %v1261
    %v1350 = vpack.c.b16 %v1270, %v1262
    %v1351 = vpack.c.b16 %v1271, %v1263
    %v1352 = vpack.c.b16 %v1272, %v1264
    %v1353 = vpack.c.b16 %v1273, %v1265
    %v1354 = vpack.c.b16 %v1274, %v1266
    %vm1425 = vcmask 523264
    %v1427 = vsel %vm1425, %v1282, 0
    %v1430 = vsel %vm1425, %v1290, 0
    %v1433 = vsel %vm1425, %v1298, 0
    %v1436 = vsel %vm1425, %v1306, 0
    %v1439 = vsel %vm1425, %v1314, 0
    %v1442 = vsel %vm1425, %v1322, 0
    %v1445 = vsel %vm1425, %v1330, 0
    %v1448 = vsel %vm1425, %v1338, 0
    %v1451 = vsel %vm1425, %v1346, 0
    %v1454 = vsel %vm1425, %v1354, 0
    %1456 = vmatprep.subr.bf16.mxu0 %v916
    %1457 = vmatpush1.bf16.msra.mxu0 %v915
    %1458 = vmatprep.subr.bf16.mxu0 %v918
    %1459 = vmatpush1.bf16.msra.mxu0 %v917
    %1460 = vmatprep.subr.bf16.mxu0 %v920
    %1461 = vmatpush1.bf16.msra.mxu0 %v919
    %1462 = vmatprep.subr.bf16.mxu0 %v922
    %1463 = vmatpush1.bf16.msra.mxu0 %v921
    %1464 = vmatprep.subr.bf16.mxu0 %v924
    %1465 = vmatpush1.bf16.msra.mxu0 %v923
    %1466 = vmatprep.subr.bf16.mxu0 %v926
    %1467 = vmatpush1.bf16.msra.mxu0 %v925
    %1468 = vmatprep.subr.bf16.mxu0 %v928
    %1469 = vmatpush1.bf16.msra.mxu0 %v927
    %1470 = vmatprep.subr.bf16.mxu0 %v930
    %1471 = vmatpush1.bf16.msra.mxu0 %v929
    %1472 = vmatprep.subr.bf16.mxu0 %v932
    %1473 = vmatpush1.bf16.msra.mxu0 %v931
    %1474 = vmatprep.subr.bf16.mxu0 %v934
    %1475 = vmatpush1.bf16.msra.mxu0 %v933
    %1476 = vmatprep.subr.bf16.mxu0 %v936
    %1477 = vmatpush1.bf16.msra.mxu0 %v935
    %1478 = vmatprep.subr.bf16.mxu0 %v938
    %1479 = vmatpush1.bf16.msra.mxu0 %v937
    %1480 = vmatprep.subr.bf16.mxu0 %v940
    %1481 = vmatpush1.bf16.msra.mxu0 %v939
    %1482 = vmatprep.subr.bf16.mxu0 %v942
    %1483 = vmatpush1.bf16.msra.mxu0 %v941
    %1484 = vmatprep.subr.bf16.mxu0 %v944
    %1485 = vmatpush1.bf16.msra.mxu0 %v943
    %1486 = vmatprep.subr.bf16.mxu0 %v946
    %1487 = vmatpush1.bf16.msra.mxu0 %v945
    %1488 = vmatprep.mubr.bf16.mxu0 %v1276
    %1489 = vmatmul.mubr.bf16.gmra.mrb[0].mxu0 %v1275
    %v1490 = vpop.f32.mrb[0].mxu0
    %v1491 = vadd.f32 0.0, %v1490
    %v1492 = vpop.f32.mrb[0].mxu0
    %v1493 = vadd.f32 0.0, %v1492
    %v1494 = vpop.f32.mrb[0].mxu0
    %v1495 = vadd.f32 0.0, %v1494
    %v1496 = vpop.f32.mrb[0].mxu0
    %v1497 = vadd.f32 0.0, %v1496
    %1498 = vmatprep.mubr.bf16.mxu0 %v1284
    %1499 = vmatmul.mubr.bf16.gmra.mrb[0].mxu0 %v1283
    %v1500 = vpop.f32.mrb[0].mxu0
    %v1501 = vadd.f32 0.0, %v1500
    %v1502 = vpop.f32.mrb[0].mxu0
    %v1503 = vadd.f32 0.0, %v1502
    %v1504 = vpop.f32.mrb[0].mxu0
    %v1505 = vadd.f32 0.0, %v1504
    %v1506 = vpop.f32.mrb[0].mxu0
    %v1507 = vadd.f32 0.0, %v1506
    %1508 = vmatprep.mubr.bf16.mxu0 %v1292
    %1509 = vmatmul.mubr.bf16.gmra.mrb[0].mxu0 %v1291
    %v1510 = vpop.f32.mrb[0].mxu0
    %v1511 = vadd.f32 0.0, %v1510
    %v1512 = vpop.f32.mrb[0].mxu0
    %v1513 = vadd.f32 0.0, %v1512
    %v1514 = vpop.f32.mrb[0].mxu0
    %v1515 = vadd.f32 0.0, %v1514
    %v1516 = vpop.f32.mrb[0].mxu0
    %v1517 = vadd.f32 0.0, %v1516
    %1518 = vmatprep.mubr.bf16.mxu0 %v1300
    %1519 = vmatmul.mubr.bf16.gmra.mrb[0].mxu0 %v1299
    %v1520 = vpop.f32.mrb[0].mxu0
    %v1521 = vadd.f32 0.0, %v1520
    %v1522 = vpop.f32.mrb[0].mxu0
    %v1523 = vadd.f32 0.0, %v1522
    %v1524 = vpop.f32.mrb[0].mxu0
    %v1525 = vadd.f32 0.0, %v1524
    %v1526 = vpop.f32.mrb[0].mxu0
    %v1527 = vadd.f32 0.0, %v1526
    %1528 = vmatprep.mubr.bf16.mxu0 %v1308
    %1529 = vmatmul.mubr.bf16.gmra.mrb[0].mxu0 %v1307
    %v1530 = vpop.f32.mrb[0].mxu0
    %v1531 = vadd.f32 0.0, %v1530
    %v1532 = vpop.f32.mrb[0].mxu0
    %v1533 = vadd.f32 0.0, %v1532
    %v1534 = vpop.f32.mrb[0].mxu0
    %v1535 = vadd.f32 0.0, %v1534
    %v1536 = vpop.f32.mrb[0].mxu0
    %v1537 = vadd.f32 0.0, %v1536
    %1538 = vmatprep.mubr.bf16.mxu0 %v1316
    %1539 = vmatmul.mubr.bf16.gmra.mrb[0].mxu0 %v1315
    %v1540 = vpop.f32.mrb[0].mxu0
    %v1541 = vadd.f32 0.0, %v1540
    %v1542 = vpop.f32.mrb[0].mxu0
    %v1543 = vadd.f32 0.0, %v1542
    %v1544 = vpop.f32.mrb[0].mxu0
    %v1545 = vadd.f32 0.0, %v1544
    %v1546 = vpop.f32.mrb[0].mxu0
    %v1547 = vadd.f32 0.0, %v1546
    %1548 = vmatprep.mubr.bf16.mxu0 %v1324
    %1549 = vmatmul.mubr.bf16.gmra.mrb[0].mxu0 %v1323
    %v1550 = vpop.f32.mrb[0].mxu0
    %v1551 = vadd.f32 0.0, %v1550
    %v1552 = vpop.f32.mrb[0].mxu0
    %v1553 = vadd.f32 0.0, %v1552
    %v1554 = vpop.f32.mrb[0].mxu0
    %v1555 = vadd.f32 0.0, %v1554
    %v1556 = vpop.f32.mrb[0].mxu0
    %v1557 = vadd.f32 0.0, %v1556
    %1558 = vmatprep.mubr.bf16.mxu0 %v1332
    %1559 = vmatmul.mubr.bf16.gmra.mrb[0].mxu0 %v1331
    %v1560 = vpop.f32.mrb[0].mxu0
    %v1561 = vadd.f32 0.0, %v1560
    %v1562 = vpop.f32.mrb[0].mxu0
    %v1563 = vadd.f32 0.0, %v1562
    %v1564 = vpop.f32.mrb[0].mxu0
    %v1565 = vadd.f32 0.0, %v1564
    %v1566 = vpop.f32.mrb[0].mxu0
    %v1567 = vadd.f32 0.0, %v1566
    %1568 = vmatprep.mubr.bf16.mxu0 %v1340
    %1569 = vmatmul.mubr.bf16.gmra.mrb[0].mxu0 %v1339
    %v1570 = vpop.f32.mrb[0].mxu0
    %v1571 = vadd.f32 0.0, %v1570
    %v1572 = vpop.f32.mrb[0].mxu0
    %v1573 = vadd.f32 0.0, %v1572
    %v1574 = vpop.f32.mrb[0].mxu0
    %v1575 = vadd.f32 0.0, %v1574
    %v1576 = vpop.f32.mrb[0].mxu0
    %v1577 = vadd.f32 0.0, %v1576
    %1578 = vmatprep.mubr.bf16.mxu0 %v1348
    %1579 = vmatmul.mubr.bf16.gmra.mrb[0].mxu0 %v1347
    %v1580 = vpop.f32.mrb[0].mxu0
    %v1581 = vadd.f32 0.0, %v1580
    %v1582 = vpop.f32.mrb[0].mxu0
    %v1583 = vadd.f32 0.0, %v1582
    %v1584 = vpop.f32.mrb[0].mxu0
    %v1585 = vadd.f32 0.0, %v1584
    %v1586 = vpop.f32.mrb[0].mxu0
    %v1587 = vadd.f32 0.0, %v1586
    %1588 = vdwg.mxu0
    %1589 = vmatprep.subr.bf16.mxu0 %v948
    %1590 = vmatpush1.bf16.msra.mxu0 %v947
    %1591 = vmatprep.subr.bf16.mxu0 %v950
    %1592 = vmatpush1.bf16.msra.mxu0 %v949
    %1593 = vmatprep.subr.bf16.mxu0 %v952
    %1594 = vmatpush1.bf16.msra.mxu0 %v951
    %1595 = vmatprep.subr.bf16.mxu0 %v954
    %1596 = vmatpush1.bf16.msra.mxu0 %v953
    %1597 = vmatprep.subr.bf16.mxu0 %v956
    %1598 = vmatpush1.bf16.msra.mxu0 %v955
    %1599 = vmatprep.subr.bf16.mxu0 %v958
    %1600 = vmatpush1.bf16.msra.mxu0 %v957
    %1601 = vmatprep.subr.bf16.mxu0 %v960
    %1602 = vmatpush1.bf16.msra.mxu0 %v959
    %1603 = vmatprep.subr.bf16.mxu0 %v962
    %1604 = vmatpush1.bf16.msra.mxu0 %v961
    %1605 = vmatprep.subr.bf16.mxu0 %v964
    %1606 = vmatpush1.bf16.msra.mxu0 %v963
    %1607 = vmatprep.subr.bf16.mxu0 %v966
    %1608 = vmatpush1.bf16.msra.mxu0 %v965
    %1609 = vmatprep.subr.bf16.mxu0 %v968
    %1610 = vmatpush1.bf16.msra.mxu0 %v967
    %1611 = vmatprep.subr.bf16.mxu0 %v970
    %1612 = vmatpush1.bf16.msra.mxu0 %v969
    %1613 = vmatprep.subr.bf16.mxu0 %v972
    %1614 = vmatpush1.bf16.msra.mxu0 %v971
    %1615 = vmatprep.subr.bf16.mxu0 %v974
    %1616 = vmatpush1.bf16.msra.mxu0 %v973
    %1617 = vmatprep.subr.bf16.mxu0 %v976
    %1618 = vmatpush1.bf16.msra.mxu0 %v975
    %1619 = vmatprep.subr.bf16.mxu0 %v978
    %1620 = vmatpush1.bf16.msra.mxu0 %v977
    %1621 = vmatprep.mubr.bf16.mxu0 %v1278
    %1622 = vmatmul.mubr.bf16.gmra.mrb[0].mxu0 %v1277
    %v1623 = vpop.f32.mrb[0].mxu0
    %v1624 = vadd.f32 %v1491, %v1623
    %v1625 = vpop.f32.mrb[0].mxu0
    %v1626 = vadd.f32 %v1493, %v1625
    %v1627 = vpop.f32.mrb[0].mxu0
    %v1628 = vadd.f32 %v1495, %v1627
    %v1629 = vpop.f32.mrb[0].mxu0
    %v1630 = vadd.f32 %v1497, %v1629
    %1631 = vmatprep.mubr.bf16.mxu0 %v1286
    %1632 = vmatmul.mubr.bf16.gmra.mrb[0].mxu0 %v1285
    %v1633 = vpop.f32.mrb[0].mxu0
    %v1634 = vadd.f32 %v1501, %v1633
    %v1635 = vpop.f32.mrb[0].mxu0
    %v1636 = vadd.f32 %v1503, %v1635
    %v1637 = vpop.f32.mrb[0].mxu0
    %v1638 = vadd.f32 %v1505, %v1637
    %v1639 = vpop.f32.mrb[0].mxu0
    %v1640 = vadd.f32 %v1507, %v1639
    %1641 = vmatprep.mubr.bf16.mxu0 %v1294
    %1642 = vmatmul.mubr.bf16.gmra.mrb[0].mxu0 %v1293
    %v1643 = vpop.f32.mrb[0].mxu0
    %v1644 = vadd.f32 %v1511, %v1643
    %v1645 = vpop.f32.mrb[0].mxu0
    %v1646 = vadd.f32 %v1513, %v1645
    %v1647 = vpop.f32.mrb[0].mxu0
    %v1648 = vadd.f32 %v1515, %v1647
    %v1649 = vpop.f32.mrb[0].mxu0
    %v1650 = vadd.f32 %v1517, %v1649
    %1651 = vmatprep.mubr.bf16.mxu0 %v1302
    %1652 = vmatmul.mubr.bf16.gmra.mrb[0].mxu0 %v1301
    %v1653 = vpop.f32.mrb[0].mxu0
    %v1654 = vadd.f32 %v1521, %v1653
    %v1655 = vpop.f32.mrb[0].mxu0
    %v1656 = vadd.f32 %v1523, %v1655
    %v1657 = vpop.f32.mrb[0].mxu0
    %v1658 = vadd.f32 %v1525, %v1657
    %v1659 = vpop.f32.mrb[0].mxu0
    %v1660 = vadd.f32 %v1527, %v1659
    %1661 = vmatprep.mubr.bf16.mxu0 %v1310
    %1662 = vmatmul.mubr.bf16.gmra.mrb[0].mxu0 %v1309
    %v1663 = vpop.f32.mrb[0].mxu0
    %v1664 = vadd.f32 %v1531, %v1663
    %v1665 = vpop.f32.mrb[0].mxu0
    %v1666 = vadd.f32 %v1533, %v1665
    %v1667 = vpop.f32.mrb[0].mxu0
    %v1668 = vadd.f32 %v1535, %v1667
    %v1669 = vpop.f32.mrb[0].mxu0
    %v1670 = vadd.f32 %v1537, %v1669
    %1671 = vmatprep.mubr.bf16.mxu0 %v1318
    %1672 = vmatmul.mubr.bf16.gmra.mrb[0].mxu0 %v1317
    %v1673 = vpop.f32.mrb[0].mxu0
    %v1674 = vadd.f32 %v1541, %v1673
    %v1675 = vpop.f32.mrb[0].mxu0
    %v1676 = vadd.f32 %v1543, %v1675
    %v1677 = vpop.f32.mrb[0].mxu0
    %v1678 = vadd.f32 %v1545, %v1677
    %v1679 = vpop.f32.mrb[0].mxu0
    %v1680 = vadd.f32 %v1547, %v1679
    %1681 = vmatprep.mubr.bf16.mxu0 %v1326
    %1682 = vmatmul.mubr.bf16.gmra.mrb[0].mxu0 %v1325
    %v1683 = vpop.f32.mrb[0].mxu0
    %v1684 = vadd.f32 %v1551, %v1683
    %v1685 = vpop.f32.mrb[0].mxu0
    %v1686 = vadd.f32 %v1553, %v1685
    %v1687 = vpop.f32.mrb[0].mxu0
    %v1688 = vadd.f32 %v1555, %v1687
    %v1689 = vpop.f32.mrb[0].mxu0
    %v1690 = vadd.f32 %v1557, %v1689
    %1691 = vmatprep.mubr.bf16.mxu0 %v1334
    %1692 = vmatmul.mubr.bf16.gmra.mrb[0].mxu0 %v1333
    %v1693 = vpop.f32.mrb[0].mxu0
    %v1694 = vadd.f32 %v1561, %v1693
    %v1695 = vpop.f32.mrb[0].mxu0
    %v1696 = vadd.f32 %v1563, %v1695
    %v1697 = vpop.f32.mrb[0].mxu0
    %v1698 = vadd.f32 %v1565, %v1697
    %v1699 = vpop.f32.mrb[0].mxu0
    %v1700 = vadd.f32 %v1567, %v1699
    %1701 = vmatprep.mubr.bf16.mxu0 %v1342
    %1702 = vmatmul.mubr.bf16.gmra.mrb[0].mxu0 %v1341
    %v1703 = vpop.f32.mrb[0].mxu0
    %v1704 = vadd.f32 %v1571, %v1703
    %v1705 = vpop.f32.mrb[0].mxu0
    %v1706 = vadd.f32 %v1573, %v1705
    %v1707 = vpop.f32.mrb[0].mxu0
    %v1708 = vadd.f32 %v1575, %v1707
    %v1709 = vpop.f32.mrb[0].mxu0
    %v1710 = vadd.f32 %v1577, %v1709
    %1711 = vmatprep.mubr.bf16.mxu0 %v1350
    %1712 = vmatmul.mubr.bf16.gmra.mrb[0].mxu0 %v1349
    %v1713 = vpop.f32.mrb[0].mxu0
    %v1714 = vadd.f32 %v1581, %v1713
    %v1715 = vpop.f32.mrb[0].mxu0
    %v1716 = vadd.f32 %v1583, %v1715
    %v1717 = vpop.f32.mrb[0].mxu0
    %v1718 = vadd.f32 %v1585, %v1717
    %v1719 = vpop.f32.mrb[0].mxu0
    %v1720 = vadd.f32 %v1587, %v1719
    %1721 = vdwg.mxu0
    %1722 = vmatprep.subr.bf16.mxu0 %v980
    %1723 = vmatpush1.bf16.msra.mxu0 %v979
    %1724 = vmatprep.subr.bf16.mxu0 %v982
    %1725 = vmatpush1.bf16.msra.mxu0 %v981
    %1726 = vmatprep.subr.bf16.mxu0 %v984
    %1727 = vmatpush1.bf16.msra.mxu0 %v983
    %1728 = vmatprep.subr.bf16.mxu0 %v986
    %1729 = vmatpush1.bf16.msra.mxu0 %v985
    %1730 = vmatprep.subr.bf16.mxu0 %v988
    %1731 = vmatpush1.bf16.msra.mxu0 %v987
    %1732 = vmatprep.subr.bf16.mxu0 %v990
    %1733 = vmatpush1.bf16.msra.mxu0 %v989
    %1734 = vmatprep.subr.bf16.mxu0 %v992
    %1735 = vmatpush1.bf16.msra.mxu0 %v991
    %1736 = vmatprep.subr.bf16.mxu0 %v994
    %1737 = vmatpush1.bf16.msra.mxu0 %v993
    %1738 = vmatprep.subr.bf16.mxu0 %v996
    %1739 = vmatpush1.bf16.msra.mxu0 %v995
    %1740 = vmatprep.subr.bf16.mxu0 %v998
    %1741 = vmatpush1.bf16.msra.mxu0 %v997
    %1742 = vmatprep.subr.bf16.mxu0 %v1000
    %1743 = vmatpush1.bf16.msra.mxu0 %v999
    %1744 = vmatprep.subr.bf16.mxu0 %v1002
    %1745 = vmatpush1.bf16.msra.mxu0 %v1001
    %1746 = vmatprep.subr.bf16.mxu0 %v1004
    %1747 = vmatpush1.bf16.msra.mxu0 %v1003
    %1748 = vmatprep.subr.bf16.mxu0 %v1006
    %1749 = vmatpush1.bf16.msra.mxu0 %v1005
    %1750 = vmatprep.subr.bf16.mxu0 %v1008
    %1751 = vmatpush1.bf16.msra.mxu0 %v1007
    %1752 = vmatprep.subr.bf16.mxu0 %v1010
    %1753 = vmatpush1.bf16.msra.mxu0 %v1009
    %1754 = vmatprep.mubr.bf16.mxu0 %v1280
    %1755 = vmatmul.mubr.bf16.gmra.mrb[0].mxu0 %v1279
    %v1756 = vpop.f32.mrb[0].mxu0
    %v1757 = vadd.f32 %v1624, %v1756
    %v1758 = vpop.f32.mrb[0].mxu0
    %v1759 = vadd.f32 %v1626, %v1758
    %v1760 = vpop.f32.mrb[0].mxu0
    %v1761 = vadd.f32 %v1628, %v1760
    %v1762 = vpop.f32.mrb[0].mxu0
    %v1763 = vadd.f32 %v1630, %v1762
    %1764 = vmatprep.mubr.bf16.mxu0 %v1288
    %1765 = vmatmul.mubr.bf16.gmra.mrb[0].mxu0 %v1287
    %v1766 = vpop.f32.mrb[0].mxu0
    %v1767 = vadd.f32 %v1634, %v1766
    %v1768 = vpop.f32.mrb[0].mxu0
    %v1769 = vadd.f32 %v1636, %v1768
    %v1770 = vpop.f32.mrb[0].mxu0
    %v1771 = vadd.f32 %v1638, %v1770
    %v1772 = vpop.f32.mrb[0].mxu0
    %v1773 = vadd.f32 %v1640, %v1772
    %1774 = vmatprep.mubr.bf16.mxu0 %v1296
    %1775 = vmatmul.mubr.bf16.gmra.mrb[0].mxu0 %v1295
    %v1776 = vpop.f32.mrb[0].mxu0
    %v1777 = vadd.f32 %v1644, %v1776
    %v1778 = vpop.f32.mrb[0].mxu0
    %v1779 = vadd.f32 %v1646, %v1778
    %v1780 = vpop.f32.mrb[0].mxu0
    %v1781 = vadd.f32 %v1648, %v1780
    %v1782 = vpop.f32.mrb[0].mxu0
    %v1783 = vadd.f32 %v1650, %v1782
    %1784 = vmatprep.mubr.bf16.mxu0 %v1304
    %1785 = vmatmul.mubr.bf16.gmra.mrb[0].mxu0 %v1303
    %v1786 = vpop.f32.mrb[0].mxu0
    %v1787 = vadd.f32 %v1654, %v1786
    %v1788 = vpop.f32.mrb[0].mxu0
    %v1789 = vadd.f32 %v1656, %v1788
    %v1790 = vpop.f32.mrb[0].mxu0
    %v1791 = vadd.f32 %v1658, %v1790
    %v1792 = vpop.f32.mrb[0].mxu0
    %v1793 = vadd.f32 %v1660, %v1792
    %1794 = vmatprep.mubr.bf16.mxu0 %v1312
    %1795 = vmatmul.mubr.bf16.gmra.mrb[0].mxu0 %v1311
    %v1796 = vpop.f32.mrb[0].mxu0
    %v1797 = vadd.f32 %v1664, %v1796
    %v1798 = vpop.f32.mrb[0].mxu0
    %v1799 = vadd.f32 %v1666, %v1798
    %v1800 = vpop.f32.mrb[0].mxu0
    %v1801 = vadd.f32 %v1668, %v1800
    %v1802 = vpop.f32.mrb[0].mxu0
    %v1803 = vadd.f32 %v1670, %v1802
    %1804 = vmatprep.mubr.bf16.mxu0 %v1320
    %1805 = vmatmul.mubr.bf16.gmra.mrb[0].mxu0 %v1319
    %v1806 = vpop.f32.mrb[0].mxu0
    %v1807 = vadd.f32 %v1674, %v1806
    %v1808 = vpop.f32.mrb[0].mxu0
    %v1809 = vadd.f32 %v1676, %v1808
    %v1810 = vpop.f32.mrb[0].mxu0
    %v1811 = vadd.f32 %v1678, %v1810
    %v1812 = vpop.f32.mrb[0].mxu0
    %v1813 = vadd.f32 %v1680, %v1812
    %1814 = vmatprep.mubr.bf16.mxu0 %v1328
    %1815 = vmatmul.mubr.bf16.gmra.mrb[0].mxu0 %v1327
    %v1816 = vpop.f32.mrb[0].mxu0
    %v1817 = vadd.f32 %v1684, %v1816
    %v1818 = vpop.f32.mrb[0].mxu0
    %v1819 = vadd.f32 %v1686, %v1818
    %v1820 = vpop.f32.mrb[0].mxu0
    %v1821 = vadd.f32 %v1688, %v1820
    %v1822 = vpop.f32.mrb[0].mxu0
    %v1823 = vadd.f32 %v1690, %v1822
    %1824 = vmatprep.mubr.bf16.mxu0 %v1336
    %1825 = vmatmul.mubr.bf16.gmra.mrb[0].mxu0 %v1335
    %v1826 = vpop.f32.mrb[0].mxu0
    %v1827 = vadd.f32 %v1694, %v1826
    %v1828 = vpop.f32.mrb[0].mxu0
    %v1829 = vadd.f32 %v1696, %v1828
    %v1830 = vpop.f32.mrb[0].mxu0
    %v1831 = vadd.f32 %v1698, %v1830
    %v1832 = vpop.f32.mrb[0].mxu0
    %v1833 = vadd.f32 %v1700, %v1832
    %1834 = vmatprep.mubr.bf16.mxu0 %v1344
    %1835 = vmatmul.mubr.bf16.gmra.mrb[0].mxu0 %v1343
    %v1836 = vpop.f32.mrb[0].mxu0
    %v1837 = vadd.f32 %v1704, %v1836
    %v1838 = vpop.f32.mrb[0].mxu0
    %v1839 = vadd.f32 %v1706, %v1838
    %v1840 = vpop.f32.mrb[0].mxu0
    %v1841 = vadd.f32 %v1708, %v1840
    %v1842 = vpop.f32.mrb[0].mxu0
    %v1843 = vadd.f32 %v1710, %v1842
    %1844 = vmatprep.mubr.bf16.mxu0 %v1352
    %1845 = vmatmul.mubr.bf16.gmra.mrb[0].mxu0 %v1351
    %v1846 = vpop.f32.mrb[0].mxu0
    %v1847 = vadd.f32 %v1714, %v1846
    %v1848 = vpop.f32.mrb[0].mxu0
    %v1849 = vadd.f32 %v1716, %v1848
    %v1850 = vpop.f32.mrb[0].mxu0
    %v1851 = vadd.f32 %v1718, %v1850
    %v1852 = vpop.f32.mrb[0].mxu0
    %v1853 = vadd.f32 %v1720, %v1852
    %1854 = vdwg.mxu0
    %1855 = vmatprep.subr.bf16.mxu0 %v1012
    %1856 = vmatpush1.bf16.msra.mxu0 %v1011
    %1857 = vmatprep.subr.bf16.mxu0 %v1014
    %1858 = vmatpush1.bf16.msra.mxu0 %v1013
    %1859 = vmatprep.subr.bf16.mxu0 %v1016
    %1860 = vmatpush1.bf16.msra.mxu0 %v1015
    %1861 = vmatprep.subr.bf16.mxu0 %v1018
    %1862 = vmatpush1.bf16.msra.mxu0 %v1017
    %1863 = vmatprep.subr.bf16.mxu0 %v1020
    %1864 = vmatpush1.bf16.msra.mxu0 %v1019
    %1865 = vmatprep.subr.bf16.mxu0 %v1022
    %1866 = vmatpush1.bf16.msra.mxu0 %v1021
    %1867 = vmatprep.subr.bf16.mxu0 %v1024
    %1868 = vmatpush1.bf16.msra.mxu0 %v1023
    %1869 = vmatprep.subr.bf16.mxu0 %v1026
    %1870 = vmatpush1.bf16.msra.mxu0 %v1025
    %1871 = vmatprep.subr.bf16.mxu0 %v1028
    %1872 = vmatpush1.bf16.msra.mxu0 %v1027
    %1873 = vmatprep.subr.bf16.mxu0 %v1030
    %1874 = vmatpush1.bf16.msra.mxu0 %v1029
    %1875 = vmatprep.subr.bf16.mxu0 %v1032
    %1876 = vmatpush1.bf16.msra.mxu0 %v1031
    %1877 = vmatprep.subr.bf16.mxu0 %v1034
    %1878 = vmatpush1.bf16.msra.mxu0 %v1033
    %1879 = vmatprep.subr.bf16.mxu0 0
    %1880 = vmatpush1.bf16.msra.mxu0 0
    %1881 = vmatprep.subr.bf16.mxu0 0
    %1882 = vmatpush1.bf16.msra.mxu0 0
    %1883 = vmatprep.subr.bf16.mxu0 0
    %1884 = vmatpush1.bf16.msra.mxu0 0
    %1885 = vmatprep.subr.bf16.mxu0 0
    %1886 = vmatpush1.bf16.msra.mxu0 0
    %1887 = vmatprep.mubr.bf16.mxu0 %v1427
    %1888 = vmatmul.mubr.bf16.gmra.mrb[0].mxu0 %v1281
    %v1889 = vpop.f32.mrb[0].mxu0
    %v1890 = vadd.f32 %v1757, %v1889
    %v1891 = vpop.f32.mrb[0].mxu0
    %v1892 = vadd.f32 %v1759, %v1891
    %v1893 = vpop.f32.mrb[0].mxu0
    %v1894 = vadd.f32 %v1761, %v1893
    %v1895 = vpop.f32.mrb[0].mxu0
    %v1896 = vadd.f32 %v1763, %v1895
    %1897 = vmatprep.mubr.bf16.mxu0 %v1430
    %1898 = vmatmul.mubr.bf16.gmra.mrb[0].mxu0 %v1289
    %v1899 = vpop.f32.mrb[0].mxu0
    %v1900 = vadd.f32 %v1767, %v1899
    %v1901 = vpop.f32.mrb[0].mxu0
    %v1902 = vadd.f32 %v1769, %v1901
    %v1903 = vpop.f32.mrb[0].mxu0
    %v1904 = vadd.f32 %v1771, %v1903
    %v1905 = vpop.f32.mrb[0].mxu0
    %v1906 = vadd.f32 %v1773, %v1905
    %1907 = vmatprep.mubr.bf16.mxu0 %v1433
    %1908 = vmatmul.mubr.bf16.gmra.mrb[0].mxu0 %v1297
    %v1909 = vpop.f32.mrb[0].mxu0
    %v1910 = vadd.f32 %v1777, %v1909
    %v1911 = vpop.f32.mrb[0].mxu0
    %v1912 = vadd.f32 %v1779, %v1911
    %v1913 = vpop.f32.mrb[0].mxu0
    %v1914 = vadd.f32 %v1781, %v1913
    %v1915 = vpop.f32.mrb[0].mxu0
    %v1916 = vadd.f32 %v1783, %v1915
    %1917 = vmatprep.mubr.bf16.mxu0 %v1436
    %1918 = vmatmul.mubr.bf16.gmra.mrb[0].mxu0 %v1305
    %v1919 = vpop.f32.mrb[0].mxu0
    %v1920 = vadd.f32 %v1787, %v1919
    %v1921 = vpop.f32.mrb[0].mxu0
    %v1922 = vadd.f32 %v1789, %v1921
    %v1923 = vpop.f32.mrb[0].mxu0
    %v1924 = vadd.f32 %v1791, %v1923
    %v1925 = vpop.f32.mrb[0].mxu0
    %v1926 = vadd.f32 %v1793, %v1925
    %1927 = vmatprep.mubr.bf16.mxu0 %v1439
    %1928 = vmatmul.mubr.bf16.gmra.mrb[0].mxu0 %v1313
    %v1929 = vpop.f32.mrb[0].mxu0
    %v1930 = vadd.f32 %v1797, %v1929
    %v1931 = vpop.f32.mrb[0].mxu0
    %v1932 = vadd.f32 %v1799, %v1931
    %v1933 = vpop.f32.mrb[0].mxu0
    %v1934 = vadd.f32 %v1801, %v1933
    %v1935 = vpop.f32.mrb[0].mxu0
    %v1936 = vadd.f32 %v1803, %v1935
    %1937 = vmatprep.mubr.bf16.mxu0 %v1442
    %1938 = vmatmul.mubr.bf16.gmra.mrb[0].mxu0 %v1321
    %v1939 = vpop.f32.mrb[0].mxu0
    %v1940 = vadd.f32 %v1807, %v1939
    %v1941 = vpop.f32.mrb[0].mxu0
    %v1942 = vadd.f32 %v1809, %v1941
    %v1943 = vpop.f32.mrb[0].mxu0
    %v1944 = vadd.f32 %v1811, %v1943
    %v1945 = vpop.f32.mrb[0].mxu0
    %v1946 = vadd.f32 %v1813, %v1945
    %1947 = vmatprep.mubr.bf16.mxu0 %v1445
    %1948 = vmatmul.mubr.bf16.gmra.mrb[0].mxu0 %v1329
    %v1949 = vpop.f32.mrb[0].mxu0
    %v1950 = vadd.f32 %v1817, %v1949
    %v1951 = vpop.f32.mrb[0].mxu0
    %v1952 = vadd.f32 %v1819, %v1951
    %v1953 = vpop.f32.mrb[0].mxu0
    %v1954 = vadd.f32 %v1821, %v1953
    %v1955 = vpop.f32.mrb[0].mxu0
    %v1956 = vadd.f32 %v1823, %v1955
    %1957 = vmatprep.mubr.bf16.mxu0 %v1448
    %1958 = vmatmul.mubr.bf16.gmra.mrb[0].mxu0 %v1337
    %v1959 = vpop.f32.mrb[0].mxu0
    %v1960 = vadd.f32 %v1827, %v1959
    %v1961 = vpop.f32.mrb[0].mxu0
    %v1962 = vadd.f32 %v1829, %v1961
    %v1963 = vpop.f32.mrb[0].mxu0
    %v1964 = vadd.f32 %v1831, %v1963
    %v1965 = vpop.f32.mrb[0].mxu0
    %v1966 = vadd.f32 %v1833, %v1965
    %1967 = vmatprep.mubr.bf16.mxu0 %v1451
    %1968 = vmatmul.mubr.bf16.gmra.mrb[0].mxu0 %v1345
    %v1969 = vpop.f32.mrb[0].mxu0
    %v1970 = vadd.f32 %v1837, %v1969
    %v1971 = vpop.f32.mrb[0].mxu0
    %v1972 = vadd.f32 %v1839, %v1971
    %v1973 = vpop.f32.mrb[0].mxu0
    %v1974 = vadd.f32 %v1841, %v1973
    %v1975 = vpop.f32.mrb[0].mxu0
    %v1976 = vadd.f32 %v1843, %v1975
    %1977 = vmatprep.mubr.bf16.mxu0 %v1454
    %1978 = vmatmul.mubr.bf16.gmra.mrb[0].mxu0 %v1353
    %v1979 = vpop.f32.mrb[0].mxu0
    %v1980 = vadd.f32 %v1847, %v1979
    %v1981 = vpop.f32.mrb[0].mxu0
    %v1982 = vadd.f32 %v1849, %v1981
    %v1983 = vpop.f32.mrb[0].mxu0
    %v1984 = vadd.f32 %v1851, %v1983
    %v1985 = vpop.f32.mrb[0].mxu0
    %v1986 = vadd.f32 %v1853, %v1985
    %1987 = vdwg.mxu0
    %1988 = vst [vmem:[#allocation2] sm:$0xff] %v1890
    %vm1989 = vcmask 556032
    %1990 = vst.msk [vmem:[#allocation2 + $0x8] sm:$0xff] %vm1989, %v1892
    %1991 = vst [vmem:[#allocation2 + $0x10] sm:$0xff] %v1894
    %1992 = vst.msk [vmem:[#allocation2 + $0x18] sm:$0xff] %vm1989, %v1896
    %1993 = vst [vmem:[#allocation2 + $0x20] sm:$0xff] %v1900
    %1994 = vst.msk [vmem:[#allocation2 + $0x28] sm:$0xff] %vm1989, %v1902
    %1995 = vst [vmem:[#allocation2 + $0x30] sm:$0xff] %v1904
    %1996 = vst.msk [vmem:[#allocation2 + $0x38] sm:$0xff] %vm1989, %v1906
    %1997 = vst [vmem:[#allocation2 + $0x40] sm:$0xff] %v1910
    %1998 = vst.msk [vmem:[#allocation2 + $0x48] sm:$0xff] %vm1989, %v1912
    %1999 = vst [vmem:[#allocation2 + $0x50] sm:$0xff] %v1914
    %2000 = vst.msk [vmem:[#allocation2 + $0x58] sm:$0xff] %vm1989, %v1916
    %2001 = vst [vmem:[#allocation2 + $0x60] sm:$0xff] %v1920
    %2002 = vst.msk [vmem:[#allocation2 + $0x68] sm:$0xff] %vm1989, %v1922
    %2003 = vst [vmem:[#allocation2 + $0x70] sm:$0xff] %v1924
    %2004 = vst.msk [vmem:[#allocation2 + $0x78] sm:$0xff] %vm1989, %v1926
    %2005 = vst [vmem:[#allocation2 + $0x80] sm:$0xff] %v1930
    %2006 = vst.msk [vmem:[#allocation2 + $0x88] sm:$0xff] %vm1989, %v1932
    %2007 = vst [vmem:[#allocation2 + $0x90] sm:$0xff] %v1934
    %2008 = vst.msk [vmem:[#allocation2 + $0x98] sm:$0xff] %vm1989, %v1936
    %2009 = vst [vmem:[#allocation2 + $0xa0] sm:$0xff] %v1940
    %2010 = vst.msk [vmem:[#allocation2 + $0xa8] sm:$0xff] %vm1989, %v1942
    %2011 = vst [vmem:[#allocation2 + $0xb0] sm:$0xff] %v1944
    %2012 = vst.msk [vmem:[#allocation2 + $0xb8] sm:$0xff] %vm1989, %v1946
    %2013 = vst [vmem:[#allocation2 + $0xc0] sm:$0xff] %v1950
    %2014 = vst.msk [vmem:[#allocation2 + $0xc8] sm:$0xff] %vm1989, %v1952
    %2015 = vst [vmem:[#allocation2 + $0xd0] sm:$0xff] %v1954
    %2016 = vst.msk [vmem:[#allocation2 + $0xd8] sm:$0xff] %vm1989, %v1956
    %2017 = vst [vmem:[#allocation2 + $0xe0] sm:$0xff] %v1960
    %2018 = vst.msk [vmem:[#allocation2 + $0xe8] sm:$0xff] %vm1989, %v1962
    %2019 = vst [vmem:[#allocation2 + $0xf0] sm:$0xff] %v1964
    %2020 = vst.msk [vmem:[#allocation2 + $0xf8] sm:$0xff] %vm1989, %v1966
    %2021 = vst [vmem:[#allocation2 + $0x100] sm:$0xff] %v1970
    %2022 = vst.msk [vmem:[#allocation2 + $0x108] sm:$0xff] %vm1989, %v1972
    %2023 = vst [vmem:[#allocation2 + $0x110] sm:$0xff] %v1974
    %2024 = vst.msk [vmem:[#allocation2 + $0x118] sm:$0xff] %vm1989, %v1976
    %2025 = vst [vmem:[#allocation2 + $0x120] sm:$0xff] %v1980
    %2026 = vst.msk [vmem:[#allocation2 + $0x128] sm:$0xff] %vm1989, %v1982
    %2027 = vst [vmem:[#allocation2 + $0x130] sm:$0xff] %v1984
    %2028 = vst.msk [vmem:[#allocation2 + $0x138] sm:$0xff] %vm1989, %v1986
    // Predicated region
    $region22: #{tpu_custom_call.1} parent=1 // pred_check
      _
    $region23: #{tpu_custom_call.1} parent=1 // pred_check_branch
      %2030 = sbr.rel (0) target = $region25
    $region24: #{tpu_custom_call.1} parent=1 // pred_region
      %s2032 = ssub.s32 5120, 5120
      %2033 = vsyncadd [#allocation3], %s2032
      %s2034 = sshll.u32 [#allocation2], 4
      %s2035 = int_to_ptr.vmem [resolvable:$true] %s2034
      %2040 = dma.vmem_to_hbm [thread:$0]  %s2035, 5120, %s5, [#allocation3], 256, 256, 16
    $region25: #{tpu_custom_call.1} parent=1 // pred_fallthru
      _
    // Predicated region
    $region26: #{tpu_custom_call.1} parent=1 // pred_check
      _
    $region27: #{tpu_custom_call.1} parent=1 // pred_check_branch
      %2042 = sbr.rel (0) target = $region29
    $region28: #{tpu_custom_call.1} parent=1 // pred_region
      %2043 = dma.done [#allocation3], 5120
    $region29: #{tpu_custom_call.1} parent=1 // pred_fallthru
      _
    %2044 = vsyncpa [#allocation3], 1

</llo_original>
